<compile_context>
chip_gen: v6e
topology: v6e:2x2x1
jax: 0.10.0
libtpu: 0.0.40
codegen_flags: <defaults>
</compile_context>

<pallas_src>
import functools

import jax
import jax.numpy as jnp
from jax import lax
from jax.experimental import pallas as pl
from jax.experimental.pallas import tpu as pltpu


def _bottleneck_kernel(x_ref, w1_ref, s1_ref, b1_ref, w2_ref, s2_ref, b2_ref,
                       w3_ref, s3_ref, b3_ref, out_ref, mid_ref,
                       *, H, W, Cin, Cp):
    # x_ref: (1, H*W, Cin) f32 block for this image.
    x = x_ref[0]                                            # (H*W, Cin) f32

    # ---- conv1 (1x1) + bn1 + relu : single bf16 matmul, f32 accumulation ----
    y1 = jnp.dot(x.astype(jnp.bfloat16), w1_ref[...],
                 preferred_element_type=jnp.float32)        # (H*W, Cp)
    y1 = jnp.maximum(y1 * s1_ref[0] + b1_ref[0], 0.0)

    # ---- conv2 (3x3, stride=1, pad=1) ----
    # Zero only the 1-pixel halo of the scratch; the interior is overwritten.
    zrow = jnp.zeros((1, W + 2, Cp), jnp.float32)
    mid_ref[0:1] = zrow
    mid_ref[H + 1:H + 2] = zrow
    zcol = jnp.zeros((H + 2, 1, Cp), jnp.float32)
    mid_ref[:, 0:1, :] = zcol
    mid_ref[:, W + 1:W + 2, :] = zcol
    mid_ref[1:1 + H, 1:1 + W, :] = y1.reshape(H, W, Cp)

    # im2col: gather the 9 taps into one (H*W, 9*Cp) bf16 patch -> one matmul.
    mp = mid_ref[...]                                       # (H+2, W+2, Cp)
    cols = [mp[kh:kh + H, kw:kw + W, :].reshape(H * W, Cp)
            for kh in range(3) for kw in range(3)]
    patch = jnp.concatenate(cols, axis=-1).astype(jnp.bfloat16)   # (H*W, 9*Cp)
    y2 = jnp.dot(patch, w2_ref[...], preferred_element_type=jnp.float32)
    y2 = jnp.maximum(y2 * s2_ref[0] + b2_ref[0], 0.0)       # (H*W, Cp)

    # ---- conv3 (1x1) + bn3 + residual (f32) + relu ----
    y3 = jnp.dot(y2.astype(jnp.bfloat16), w3_ref[...],
                 preferred_element_type=jnp.float32)        # (H*W, Cin)
    y3 = y3 * s3_ref[0] + b3_ref[0]
    out_ref[0] = jnp.maximum(y3 + x, 0.0)


def bottleneck_forward(x_nchw, w1, s1, b1, w2_hwio, s2, b2, w3, s3, b3):
    """x_nchw: (N, Cin, H, W) f32.  w1: (Cin, Cp), w2_hwio: (3,3,Cp,Cp),
    w3: (Cp, Cin).  s*/b* are folded eval-mode BN scale/bias vectors.
    Returns (N, Cin, H, W) f32."""
    N, Cin, H, W = x_nchw.shape
    Cp = w1.shape[1]
    Cout = w3.shape[1]
    assert Cout == Cin, "downsample=None requires inplanes == planes * expansion"

    # NCHW -> NHWC -> (N, H*W, C): channels on lanes for the matmuls.  No pad.
    x2d = jnp.transpose(x_nchw, (0, 2, 3, 1)).reshape(N, H * W, Cin)
    x2d = x2d.astype(jnp.float32)

    # bf16 matmul operands; conv2 weight pre-reshaped for im2col (kh,kw,cin rows).
    w1b = w1.astype(jnp.bfloat16)                             # (Cin, Cp)
    w2col = w2_hwio.reshape(9 * Cp, Cp).astype(jnp.bfloat16)  # (9*Cp, Cp)
    w3b = w3.astype(jnp.bfloat16)                             # (Cp, Cout)

    s1_ = s1.reshape(1, Cp).astype(jnp.float32)
    b1_ = b1.reshape(1, Cp).astype(jnp.float32)
    s2_ = s2.reshape(1, Cp).astype(jnp.float32)
    b2_ = b2.reshape(1, Cp).astype(jnp.float32)
    s3_ = s3.reshape(1, Cout).astype(jnp.float32)
    b3_ = b3.reshape(1, Cout).astype(jnp.float32)

    kernel = functools.partial(_bottleneck_kernel, H=H, W=W, Cin=Cin, Cp=Cp)

    out2d = pl.pallas_call(
        kernel,
        out_shape=jax.ShapeDtypeStruct((N, H * W, Cout), jnp.float32),
        grid_spec=pltpu.PrefetchScalarGridSpec(
            num_scalar_prefetch=0,
            grid=(N,),
            in_specs=[
                pl.BlockSpec((1, H * W, Cin), lambda n: (n, 0, 0)),   # x
                pl.BlockSpec((Cin, Cp), lambda n: (0, 0)),            # w1
                pl.BlockSpec((1, Cp), lambda n: (0, 0)),              # s1
                pl.BlockSpec((1, Cp), lambda n: (0, 0)),              # b1
                pl.BlockSpec((9 * Cp, Cp), lambda n: (0, 0)),         # w2 (im2col)
                pl.BlockSpec((1, Cp), lambda n: (0, 0)),              # s2
                pl.BlockSpec((1, Cp), lambda n: (0, 0)),              # b2
                pl.BlockSpec((Cp, Cout), lambda n: (0, 0)),           # w3
                pl.BlockSpec((1, Cout), lambda n: (0, 0)),            # s3
                pl.BlockSpec((1, Cout), lambda n: (0, 0)),            # b3
            ],
            out_specs=pl.BlockSpec((1, H * W, Cout), lambda n: (n, 0, 0)),
            scratch_shapes=[pltpu.VMEM((H + 2, W + 2, Cp), jnp.float32)],
        ),
        compiler_params=pltpu.CompilerParams(
            dimension_semantics=("parallel",),
            vmem_limit_bytes=32 * 1024 * 1024),
    )(x2d, w1b, s1_, b1_, w2col, s2_, b2_, w3b, s3_, b3_)

    # (N, H*W, C) -> NHWC -> NCHW to match the PyTorch output convention.
    return jnp.transpose(out2d.reshape(N, H, W, Cout), (0, 3, 1, 2))


def _reference_forward(x_nchw, w1, s1, b1, w2_hwio, s2, b2, w3, s3, b3,
                       quantize=False):
    """Pure-JAX reference.  With quantize=True, matmul operands are cast to
    bf16 at the same points as the kernel (f32 accumulation), which makes the
    comparison tight; with quantize=False it is the full-f32 module."""
    x = jnp.transpose(x_nchw, (0, 2, 3, 1)).astype(jnp.float32)
    if quantize:
        q = lambda a: a.astype(jnp.bfloat16).astype(jnp.float32)
    else:
        q = lambda a: a
    dn = ('NHWC', 'HWIO', 'NHWC')
    conv = lambda a, w: lax.conv_general_dilated(
        a, w, (1, 1), 'SAME', dimension_numbers=dn,
        preferred_element_type=jnp.float32)

    y = conv(q(x), q(w1.reshape(1, 1, *w1.shape)))
    y = jnp.maximum(y * s1 + b1, 0.0)
    y = conv(q(y), q(w2_hwio))
    y = jnp.maximum(y * s2 + b2, 0.0)
    y = conv(q(y), q(w3.reshape(1, 1, *w3.shape)))
    y = y * s3 + b3
    out = jnp.maximum(y + x, 0.0)
    return jnp.transpose(out, (0, 3, 1, 2))


if __name__ == "__main__":
    key = jax.random.PRNGKey(0)
    ks = jax.random.split(key, 16)

    N, planes, H, W = 2, 4, 16, 16
    inplanes = planes * 4          # expansion=4; downsample=None => inplanes == planes*4
    eps = 1e-5

    x = jax.random.normal(ks[0], (N, inplanes, H, W), jnp.float32)

    # Conv weights (PyTorch OIHW, bias=False) stored directly in matmul layouts:
    #   conv1 (planes, inplanes, 1, 1) -> (inplanes, planes)
    #   conv2 (planes, planes, 3, 3)   -> HWIO (3, 3, planes, planes)
    #   conv3 (4*planes, planes, 1, 1) -> (planes, 4*planes)
    w1 = jax.random.normal(ks[1], (inplanes, planes), jnp.float32) * (2.0 / inplanes) ** 0.5
    w2 = jax.random.normal(ks[2], (3, 3, planes, planes), jnp.float32) * (2.0 / (9 * planes)) ** 0.5
    w3 = jax.random.normal(ks[3], (planes, inplanes), jnp.float32) * (2.0 / planes) ** 0.5

    # Eval-mode BatchNorm (running stats) folded to per-channel scale/bias.
    # TODO(synk): training-mode BN (batch statistics + running-stat update) not implemented.
    def bn_fold(kg, kb, km, kv, C):
        gamma = 1.0 + 0.1 * jax.random.normal(kg, (C,), jnp.float32)
        beta = 0.1 * jax.random.normal(kb, (C,), jnp.float32)
        mean = 0.1 * jax.random.normal(km, (C,), jnp.float32)
        var = jnp.abs(jax.random.normal(kv, (C,), jnp.float32)) + 0.5
        scale = gamma / jnp.sqrt(var + eps)
        return scale, beta - mean * scale

    s1, b1 = bn_fold(ks[4], ks[5], ks[6], ks[7], planes)
    s2, b2 = bn_fold(ks[8], ks[9], ks[10], ks[11], planes)
    s3, b3 = bn_fold(ks[12], ks[13], ks[14], ks[15], inplanes)

    out = bottleneck_forward(x, w1, s1, b1, w2, s2, b2, w3, s3, b3)
    out = jax.block_until_ready(out)
    assert out.shape == (N, inplanes, H, W)

    # Tight check against a reference that quantizes matmul operands to bf16 at
    # the same points as the kernel (f32 accumulation everywhere) ...
    ref_q = _reference_forward(x, w1, s1, b1, w2, s2, b2, w3, s3, b3, quantize=True)
    assert jnp.allclose(out, ref_q, atol=1e-3, rtol=1e-3), "mismatch vs bf16-quantized reference"

    # ... plus a loose sanity check against the full-f32 reference module.
    ref_f = _reference_forward(x, w1, s1, b1, w2, s2, b2, w3, s3, b3, quantize=False)
    assert jnp.allclose(out, ref_f, atol=2.5e-1, rtol=1e-1), "mismatch vs f32 reference"

    print("KERNEL_OK")
</pallas_src>

<mosaic_0001>
module attributes {stable_mosaic.version = 11 : i64} {
  func.func @_bottleneck_kernel(%arg0: i32, %arg1: memref<1x256x16xf32, #tpu.memory_space<vmem>>, %arg2: memref<16x4xbf16, #tpu.memory_space<vmem>>, %arg3: memref<1x4xf32, #tpu.memory_space<vmem>>, %arg4: memref<1x4xf32, #tpu.memory_space<vmem>>, %arg5: memref<36x4xbf16, #tpu.memory_space<vmem>>, %arg6: memref<1x4xf32, #tpu.memory_space<vmem>>, %arg7: memref<1x4xf32, #tpu.memory_space<vmem>>, %arg8: memref<4x16xbf16, #tpu.memory_space<vmem>>, %arg9: memref<1x16xf32, #tpu.memory_space<vmem>>, %arg10: memref<1x16xf32, #tpu.memory_space<vmem>>, %arg11: memref<1x256x16xf32, #tpu.memory_space<vmem>>, %arg12: memref<18x18x4xf32, #tpu.memory_space<vmem>>) attributes {dimension_semantics = [#tpu.dimension_semantics<parallel>], iteration_bounds = array<i64: 2>, scalar_prefetch = 0 : i64, scratch_operands = 1 : i64, tpu.core_type = #tpu.core_type<tc>, window_params = [{transform_indices = @transform_0, window_bounds = array<i64: 1, 256, 16>}, {pipeline_mode = #tpu.pipeline_mode<synchronous>, transform_indices = @transform_1, window_bounds = array<i64: 16, 4>}, {pipeline_mode = #tpu.pipeline_mode<synchronous>, transform_indices = @transform_2, window_bounds = array<i64: 1, 4>}, {pipeline_mode = #tpu.pipeline_mode<synchronous>, transform_indices = @transform_3, window_bounds = array<i64: 1, 4>}, {pipeline_mode = #tpu.pipeline_mode<synchronous>, transform_indices = @transform_4, window_bounds = array<i64: 36, 4>}, {pipeline_mode = #tpu.pipeline_mode<synchronous>, transform_indices = @transform_5, window_bounds = array<i64: 1, 4>}, {pipeline_mode = #tpu.pipeline_mode<synchronous>, transform_indices = @transform_6, window_bounds = array<i64: 1, 4>}, {pipeline_mode = #tpu.pipeline_mode<synchronous>, transform_indices = @transform_7, window_bounds = array<i64: 4, 16>}, {pipeline_mode = #tpu.pipeline_mode<synchronous>, transform_indices = @transform_8, window_bounds = array<i64: 1, 16>}, {pipeline_mode = #tpu.pipeline_mode<synchronous>, transform_indices = @transform_9, window_bounds = array<i64: 1, 16>}, {transform_indices = @transform_10, window_bounds = array<i64: 1, 256, 16>}]} {
    %c0 = arith.constant 0 : index
    %c0_0 = arith.constant 0 : index
    %c0_1 = arith.constant 0 : index
    %0 = vector.load %arg1[%c0, %c0_0, %c0_1] : memref<1x256x16xf32, #tpu.memory_space<vmem>>, vector<1x256x16xf32>
    %1 = vector.shape_cast %0 : vector<1x256x16xf32> to vector<256x16xf32>
    %2 = arith.truncf %1 : vector<256x16xf32> to vector<256x16xbf16>
    %c0_2 = arith.constant 0 : index
    %c0_3 = arith.constant 0 : index
    %3 = vector.load %arg2[%c0_2, %c0_3] : memref<16x4xbf16, #tpu.memory_space<vmem>>, vector<16x4xbf16>
    %cst = arith.constant dense<0.000000e+00> : vector<256x4xf32>
    %4 = tpu.matmul %2, %3, %cst {dimension_numbers = #tpu.dot_dimension_numbers<[1], [0], [0], [1], [0, 0, 1, 1], [], []>} : vector<256x16xbf16>, vector<16x4xbf16>, vector<256x4xf32> -> vector<256x4xf32>
    %c0_4 = arith.constant 0 : index
    %c0_5 = arith.constant 0 : index
    %5 = vector.load %arg3[%c0_4, %c0_5] : memref<1x4xf32, #tpu.memory_space<vmem>>, vector<1x4xf32>
    %6 = vector.shape_cast %5 : vector<1x4xf32> to vector<4xf32>
    %7 = vector.shape_cast %6 : vector<4xf32> to vector<1x4xf32>
    %8 = vector.broadcast %7 : vector<1x4xf32> to vector<256x4xf32>
    %9 = arith.mulf %4, %8 : vector<256x4xf32>
    %c0_6 = arith.constant 0 : index
    %c0_7 = arith.constant 0 : index
    %10 = vector.load %arg4[%c0_6, %c0_7] : memref<1x4xf32, #tpu.memory_space<vmem>>, vector<1x4xf32>
    %11 = vector.shape_cast %10 : vector<1x4xf32> to vector<4xf32>
    %12 = vector.shape_cast %11 : vector<4xf32> to vector<1x4xf32>
    %13 = vector.broadcast %12 : vector<1x4xf32> to vector<256x4xf32>
    %14 = arith.addf %9, %13 : vector<256x4xf32>
    %cst_8 = arith.constant 0.000000e+00 : f32
    %15 = vector.broadcast %cst_8 : f32 to vector<256x4xf32>
    %16 = arith.maximumf %14, %15 : vector<256x4xf32>
    %cst_9 = arith.constant 0.000000e+00 : f32
    %17 = vector.broadcast %cst_9 : f32 to vector<1x18x4xf32>
    %c0_10 = arith.constant 0 : index
    %c0_11 = arith.constant 0 : index
    %c0_12 = arith.constant 0 : index
    %18 = vector.load %arg12[%c0_10, %c0_11, %c0_12] : memref<18x18x4xf32, #tpu.memory_space<vmem>>, vector<1x18x4xf32>
    tpu.vector_store %arg12[%c0_10, %c0_11, %c0_12], %17 {strides = array<i32>} : memref<18x18x4xf32, #tpu.memory_space<vmem>>, vector<1x18x4xf32>,
    %c17 = arith.constant 17 : index
    %c0_13 = arith.constant 0 : index
    %c0_14 = arith.constant 0 : index
    %19 = vector.load %arg12[%c17, %c0_13, %c0_14] : memref<18x18x4xf32, #tpu.memory_space<vmem>>, vector<1x18x4xf32>
    tpu.vector_store %arg12[%c17, %c0_13, %c0_14], %17 {strides = array<i32>} : memref<18x18x4xf32, #tpu.memory_space<vmem>>, vector<1x18x4xf32>,
    %cst_15 = arith.constant 0.000000e+00 : f32
    %20 = vector.broadcast %cst_15 : f32 to vector<18x1x4xf32>
    %c0_16 = arith.constant 0 : index
    %c0_17 = arith.constant 0 : index
    %c0_18 = arith.constant 0 : index
    %21 = vector.load %arg12[%c0_16, %c0_17, %c0_18] : memref<18x18x4xf32, #tpu.memory_space<vmem>>, vector<18x1x4xf32>
    tpu.vector_store %arg12[%c0_16, %c0_17, %c0_18], %20 {strides = array<i32>} : memref<18x18x4xf32, #tpu.memory_space<vmem>>, vector<18x1x4xf32>,
    %c0_19 = arith.constant 0 : index
    %c17_20 = arith.constant 17 : index
    %c0_21 = arith.constant 0 : index
    %22 = vector.load %arg12[%c0_19, %c17_20, %c0_21] : memref<18x18x4xf32, #tpu.memory_space<vmem>>, vector<18x1x4xf32>
    tpu.vector_store %arg12[%c0_19, %c17_20, %c0_21], %20 {strides = array<i32>} : memref<18x18x4xf32, #tpu.memory_space<vmem>>, vector<18x1x4xf32>,
    %23 = vector.shape_cast %16 : vector<256x4xf32> to vector<16x16x4xf32>
    %c1 = arith.constant 1 : index
    %c1_22 = arith.constant 1 : index
    %c0_23 = arith.constant 0 : index
    %24 = vector.load %arg12[%c1, %c1_22, %c0_23] : memref<18x18x4xf32, #tpu.memory_space<vmem>>, vector<16x16x4xf32>
    tpu.vector_store %arg12[%c1, %c1_22, %c0_23], %23 {strides = array<i32>} : memref<18x18x4xf32, #tpu.memory_space<vmem>>, vector<16x16x4xf32>,
    %c0_24 = arith.constant 0 : index
    %c0_25 = arith.constant 0 : index
    %c0_26 = arith.constant 0 : index
    %25 = vector.load %arg12[%c0_24, %c0_25, %c0_26] : memref<18x18x4xf32, #tpu.memory_space<vmem>>, vector<18x18x4xf32>
    %26 = vector.extract_strided_slice %25 {offsets = [0, 0, 0], sizes = [16, 16, 4], strides = [1, 1, 1]} : vector<18x18x4xf32> to vector<16x16x4xf32>
    %27 = vector.shape_cast %26 : vector<16x16x4xf32> to vector<256x4xf32>
    %28 = vector.extract_strided_slice %25 {offsets = [0, 1, 0], sizes = [16, 16, 4], strides = [1, 1, 1]} : vector<18x18x4xf32> to vector<16x16x4xf32>
    %29 = vector.shape_cast %28 : vector<16x16x4xf32> to vector<256x4xf32>
    %30 = vector.extract_strided_slice %25 {offsets = [0, 2, 0], sizes = [16, 16, 4], strides = [1, 1, 1]} : vector<18x18x4xf32> to vector<16x16x4xf32>
    %31 = vector.shape_cast %30 : vector<16x16x4xf32> to vector<256x4xf32>
    %32 = vector.extract_strided_slice %25 {offsets = [1, 0, 0], sizes = [16, 16, 4], strides = [1, 1, 1]} : vector<18x18x4xf32> to vector<16x16x4xf32>
    %33 = vector.shape_cast %32 : vector<16x16x4xf32> to vector<256x4xf32>
    %34 = vector.extract_strided_slice %25 {offsets = [1, 1, 0], sizes = [16, 16, 4], strides = [1, 1, 1]} : vector<18x18x4xf32> to vector<16x16x4xf32>
    %35 = vector.shape_cast %34 : vector<16x16x4xf32> to vector<256x4xf32>
    %36 = vector.extract_strided_slice %25 {offsets = [1, 2, 0], sizes = [16, 16, 4], strides = [1, 1, 1]} : vector<18x18x4xf32> to vector<16x16x4xf32>
    %37 = vector.shape_cast %36 : vector<16x16x4xf32> to vector<256x4xf32>
    %38 = vector.extract_strided_slice %25 {offsets = [2, 0, 0], sizes = [16, 16, 4], strides = [1, 1, 1]} : vector<18x18x4xf32> to vector<16x16x4xf32>
    %39 = vector.shape_cast %38 : vector<16x16x4xf32> to vector<256x4xf32>
    %40 = vector.extract_strided_slice %25 {offsets = [2, 1, 0], sizes = [16, 16, 4], strides = [1, 1, 1]} : vector<18x18x4xf32> to vector<16x16x4xf32>
    %41 = vector.shape_cast %40 : vector<16x16x4xf32> to vector<256x4xf32>
    %42 = vector.extract_strided_slice %25 {offsets = [2, 2, 0], sizes = [16, 16, 4], strides = [1, 1, 1]} : vector<18x18x4xf32> to vector<16x16x4xf32>
    %43 = vector.shape_cast %42 : vector<16x16x4xf32> to vector<256x4xf32>
    %44 = tpu.concatenate %27, %29, %31, %33, %35, %37, %39, %41, %43 in 1 : vector<256x4xf32>, vector<256x4xf32>, vector<256x4xf32>, vector<256x4xf32>, vector<256x4xf32>, vector<256x4xf32>, vector<256x4xf32>, vector<256x4xf32>, vector<256x4xf32> -> vector<256x36xf32>
    %45 = arith.truncf %44 : vector<256x36xf32> to vector<256x36xbf16>
    %c0_27 = arith.constant 0 : index
    %c0_28 = arith.constant 0 : index
    %46 = vector.load %arg5[%c0_27, %c0_28] : memref<36x4xbf16, #tpu.memory_space<vmem>>, vector<36x4xbf16>
    %cst_29 = arith.constant dense<0.000000e+00> : vector<256x4xf32>
    %47 = tpu.matmul %45, %46, %cst_29 {dimension_numbers = #tpu.dot_dimension_numbers<[1], [0], [0], [1], [0, 0, 1, 1], [], []>} : vector<256x36xbf16>, vector<36x4xbf16>, vector<256x4xf32> -> vector<256x4xf32>
    %c0_30 = arith.constant 0 : index
    %c0_31 = arith.constant 0 : index
    %48 = vector.load %arg6[%c0_30, %c0_31] : memref<1x4xf32, #tpu.memory_space<vmem>>, vector<1x4xf32>
    %49 = vector.shape_cast %48 : vector<1x4xf32> to vector<4xf32>
    %50 = vector.shape_cast %49 : vector<4xf32> to vector<1x4xf32>
    %51 = vector.broadcast %50 : vector<1x4xf32> to vector<256x4xf32>
    %52 = arith.mulf %47, %51 : vector<256x4xf32>
    %c0_32 = arith.constant 0 : index
    %c0_33 = arith.constant 0 : index
    %53 = vector.load %arg7[%c0_32, %c0_33] : memref<1x4xf32, #tpu.memory_space<vmem>>, vector<1x4xf32>
    %54 = vector.shape_cast %53 : vector<1x4xf32> to vector<4xf32>
    %55 = vector.shape_cast %54 : vector<4xf32> to vector<1x4xf32>
    %56 = vector.broadcast %55 : vector<1x4xf32> to vector<256x4xf32>
    %57 = arith.addf %52, %56 : vector<256x4xf32>
    %cst_34 = arith.constant 0.000000e+00 : f32
    %58 = vector.broadcast %cst_34 : f32 to vector<256x4xf32>
    %59 = arith.maximumf %57, %58 : vector<256x4xf32>
    %60 = arith.truncf %59 : vector<256x4xf32> to vector<256x4xbf16>
    %c0_35 = arith.constant 0 : index
    %c0_36 = arith.constant 0 : index
    %61 = vector.load %arg8[%c0_35, %c0_36] : memref<4x16xbf16, #tpu.memory_space<vmem>>, vector<4x16xbf16>
    %cst_37 = arith.constant dense<0.000000e+00> : vector<256x16xf32>
    %62 = tpu.matmul %60, %61, %cst_37 {dimension_numbers = #tpu.dot_dimension_numbers<[1], [0], [0], [1], [0, 0, 1, 1], [], []>} : vector<256x4xbf16>, vector<4x16xbf16>, vector<256x16xf32> -> vector<256x16xf32>
    %c0_38 = arith.constant 0 : index
    %c0_39 = arith.constant 0 : index
    %63 = vector.load %arg9[%c0_38, %c0_39] : memref<1x16xf32, #tpu.memory_space<vmem>>, vector<1x16xf32>
    %64 = vector.shape_cast %63 : vector<1x16xf32> to vector<16xf32>
    %65 = vector.shape_cast %64 : vector<16xf32> to vector<1x16xf32>
    %66 = vector.broadcast %65 : vector<1x16xf32> to vector<256x16xf32>
    %67 = arith.mulf %62, %66 : vector<256x16xf32>
    %c0_40 = arith.constant 0 : index
    %c0_41 = arith.constant 0 : index
    %68 = vector.load %arg10[%c0_40, %c0_41] : memref<1x16xf32, #tpu.memory_space<vmem>>, vector<1x16xf32>
    %69 = vector.shape_cast %68 : vector<1x16xf32> to vector<16xf32>
    %70 = vector.shape_cast %69 : vector<16xf32> to vector<1x16xf32>
    %71 = vector.broadcast %70 : vector<1x16xf32> to vector<256x16xf32>
    %72 = arith.addf %67, %71 : vector<256x16xf32>
    %73 = arith.addf %72, %1 : vector<256x16xf32>
    %cst_42 = arith.constant 0.000000e+00 : f32
    %74 = vector.broadcast %cst_42 : f32 to vector<256x16xf32>
    %75 = arith.maximumf %73, %74 : vector<256x16xf32>
    %c0_43 = arith.constant 0 : index
    %c0_44 = arith.constant 0 : index
    %c0_45 = arith.constant 0 : index
    %76 = vector.load %arg11[%c0_43, %c0_44, %c0_45] : memref<1x256x16xf32, #tpu.memory_space<vmem>>, vector<1x256x16xf32>
    %77 = vector.shape_cast %76 : vector<1x256x16xf32> to vector<256x16xf32>
    %78 = vector.shape_cast %75 : vector<256x16xf32> to vector<1x256x16xf32>
    tpu.vector_store %arg11[%c0_43, %c0_44, %c0_45], %78 {strides = array<i32>} : memref<1x256x16xf32, #tpu.memory_space<vmem>>, vector<1x256x16xf32>,
    return
  }
  func.func @transform_0(%arg0: i32) -> (i32, i32, i32) {
    %c0_i32 = arith.constant 0 : i32
    %c0_i32_0 = arith.constant 0 : i32
    %c0_i32_1 = arith.constant 0 : i32
    return %arg0, %c0_i32, %c0_i32_0 : i32, i32, i32
  }
  func.func @transform_1(%arg0: i32) -> (i32, i32) {
    %c0_i32 = arith.constant 0 : i32
    %c0_i32_0 = arith.constant 0 : i32
    %c0_i32_1 = arith.constant 0 : i32
    return %c0_i32, %c0_i32_0 : i32, i32
  }
  func.func @transform_2(%arg0: i32) -> (i32, i32) {
    %c0_i32 = arith.constant 0 : i32
    %c0_i32_0 = arith.constant 0 : i32
    %c0_i32_1 = arith.constant 0 : i32
    return %c0_i32, %c0_i32_0 : i32, i32
  }
  func.func @transform_3(%arg0: i32) -> (i32, i32) {
    %c0_i32 = arith.constant 0 : i32
    %c0_i32_0 = arith.constant 0 : i32
    %c0_i32_1 = arith.constant 0 : i32
    return %c0_i32, %c0_i32_0 : i32, i32
  }
  func.func @transform_4(%arg0: i32) -> (i32, i32) {
    %c0_i32 = arith.constant 0 : i32
    %c0_i32_0 = arith.constant 0 : i32
    %c0_i32_1 = arith.constant 0 : i32
    return %c0_i32, %c0_i32_0 : i32, i32
  }
  func.func @transform_5(%arg0: i32) -> (i32, i32) {
    %c0_i32 = arith.constant 0 : i32
    %c0_i32_0 = arith.constant 0 : i32
    %c0_i32_1 = arith.constant 0 : i32
    return %c0_i32, %c0_i32_0 : i32, i32
  }
  func.func @transform_6(%arg0: i32) -> (i32, i32) {
    %c0_i32 = arith.constant 0 : i32
    %c0_i32_0 = arith.constant 0 : i32
    %c0_i32_1 = arith.constant 0 : i32
    return %c0_i32, %c0_i32_0 : i32, i32
  }
  func.func @transform_7(%arg0: i32) -> (i32, i32) {
    %c0_i32 = arith.constant 0 : i32
    %c0_i32_0 = arith.constant 0 : i32
    %c0_i32_1 = arith.constant 0 : i32
    return %c0_i32, %c0_i32_0 : i32, i32
  }
  func.func @transform_8(%arg0: i32) -> (i32, i32) {
    %c0_i32 = arith.constant 0 : i32
    %c0_i32_0 = arith.constant 0 : i32
    %c0_i32_1 = arith.constant 0 : i32
    return %c0_i32, %c0_i32_0 : i32, i32
  }
  func.func @transform_9(%arg0: i32) -> (i32, i32) {
    %c0_i32 = arith.constant 0 : i32
    %c0_i32_0 = arith.constant 0 : i32
    %c0_i32_1 = arith.constant 0 : i32
    return %c0_i32, %c0_i32_0 : i32, i32
  }
  func.func @transform_10(%arg0: i32) -> (i32, i32, i32) {
    %c0_i32 = arith.constant 0 : i32
    %c0_i32_0 = arith.constant 0 : i32
    %c0_i32_1 = arith.constant 0 : i32
    return %arg0, %c0_i32, %c0_i32_0 : i32, i32, i32
  }
}

</mosaic_0001>

<llo_original>
// kernel: tpu_custom_call.1
$region0: #{tpu_custom_call.1}
  #allocation0 [shape = 'u32[]', space=smem, size = 0x4, offset = 0x4, fixed_abs, tag = 'smem constant byte address 0x4 - core index']
  #allocation1 [shape = 'u32[144,128]{1,0:T(1,128)}', space=vmem, size = 0x12000, scoped, tag = 'internal scratch']
  #allocation2 [shape = 'f32[18,18,4]{2,1,0:T(8,128)}', space=vmem, size = 0x36000, scoped, tag = 'scratch operand']
  %s0 = inlined_call_operand.vmem [shape: f32[2,256,16], index: 0, kind: input, shape index: {}]
  %s1 = inlined_call_operand.vmem [shape: bf16[16,4], index: 1, kind: input, shape index: {}]
  %s2 = inlined_call_operand.vmem [shape: f32[1,4], index: 2, kind: input, shape index: {}]
  %s3 = inlined_call_operand.vmem [shape: f32[1,4], index: 3, kind: input, shape index: {}]
  %s4 = inlined_call_operand.vmem [shape: bf16[36,4], index: 4, kind: input, shape index: {}]
  %s5 = inlined_call_operand.vmem [shape: f32[1,4], index: 5, kind: input, shape index: {}]
  %s6 = inlined_call_operand.vmem [shape: f32[1,4], index: 6, kind: input, shape index: {}]
  %s7 = inlined_call_operand.vmem [shape: bf16[4,16], index: 7, kind: input, shape index: {}]
  %s8 = inlined_call_operand.vmem [shape: f32[1,16], index: 8, kind: input, shape index: {}]
  %s9 = inlined_call_operand.vmem [shape: f32[1,16], index: 9, kind: input, shape index: {}]
  %s10 = inlined_call_operand.vmem [shape: f32[2,256,16], index: 10, kind: output, shape index: {}]
  %s11 = sld [smem:[#allocation0]]
  $region73: #{tpu_custom_call.1} parent=0
    _
  %s13 = ssub.s32 1, %s11
  %s14 = scalar_select 0, %s13, %s11
  loop: start=0, step=1, limit=4
  $region2: #{tpu_custom_call.1} parent=0 // loop_pre_header
    _
  $region3: #{tpu_custom_call.1} parent=0 // loop_header
    %s16 = sphi 0, %s20
    %p17 = scmp.ge.s32.totalorder %s16, 4
    %s26 = sphi 0, %s28
    %s29 = sphi 0, %s26
    %s30 = sphi 0, %s29
    %s46 = sphi 0, %s30
    %s50 = sphi 0, %s50
    %s52 = sphi 0, %s50
    %s53 = sphi 0, %s52
    %s67 = sphi 0, %s53
    %s71 = sphi 0, %s71
    %s73 = sphi 0, %s71
    %s74 = sphi 0, %s73
    %s88 = sphi 0, %s74
    %s92 = sphi 0, %s92
    %s94 = sphi 0, %s92
    %s95 = sphi 0, %s94
    %s109 = sphi 0, %s95
    %s113 = sphi 0, %s113
    %s115 = sphi 0, %s113
    %s116 = sphi 0, %s115
    %s130 = sphi 0, %s116
    %s134 = sphi 0, %s134
    %s136 = sphi 0, %s134
    %s137 = sphi 0, %s136
    %s151 = sphi 0, %s137
    %s155 = sphi 0, %s155
    %s157 = sphi 0, %s155
    %s158 = sphi 0, %s157
    %s172 = sphi 0, %s158
    %s176 = sphi 0, %s176
    %s178 = sphi 0, %s176
    %s179 = sphi 0, %s178
    %s193 = sphi 0, %s179
    %s197 = sphi 0, %s197
    %s199 = sphi 0, %s197
    %s200 = sphi 0, %s199
    %s214 = sphi 0, %s200
    %s218 = sphi 0, %s218
    %s220 = sphi 0, %s218
    %s221 = sphi 0, %s220
    %s235 = sphi 0, %s221
    %s241 = sphi 0, %s243
    %s244 = sphi 0, %s241
    %s245 = sphi 0, %s244
    %s261 = sphi 0, %s245
  $region4: #{tpu_custom_call.1} parent=0 // loop_header_branch
    %19 = sbr.rel (%p17) target = $region8
  $region5: #{tpu_custom_call.1} parent=0 // loop_body
    %s21 = ssub.s32 %s16, 1
    %s22 = ssub.s32 %s16, 2
    %s23 = sadd.s32 %s16, 1
    %s24 = ssub.s32 %s16, %s23
    %p25 = scmp.eq.s32.totalorder %s24, 0
    %s27 = sadd.s32 %s26, 1
    %s28 = scalar_select %p25, %s26, %s27
    %p31 = pneg %p25
    %p32 = scmp.eq.s32.totalorder %s16, 1
    %p33 = por %p31, %p32
    %p34 = scmp.ne.s32.totalorder %s26, %s29
    %p35 = scmp.eq.s32.totalorder %s16, 0
    %p36 = por %p34, %p35
    %p37 = scmp.ne.s32.totalorder %s26, %s29
    %p38 = scmp.eq.s32.totalorder %s21, 1
    %p39 = por %p37, %p38
    %p40 = scmp.ne.s32.totalorder %s29, %s30
    %p41 = scmp.eq.s32.totalorder %s21, 0
    %p42 = por %p40, %p41
    %p43 = scmp.ne.s32.totalorder %s29, %s30
    %p44 = scmp.eq.s32.totalorder %s22, 1
    %p45 = por %p43, %p44
    %p47 = scmp.ne.s32.totalorder %s30, %s46
    %p48 = scmp.eq.s32.totalorder %s22, 0
    %p49 = por %p47, %p48
    %s51 = sadd.s32 %s50, 1
    %p54 = scmp.eq.s32.totalorder %s16, 1
    %p55 = scmp.ne.s32.totalorder %s50, %s52
    %p56 = scmp.eq.s32.totalorder %s16, 0
    %p57 = por %p55, %p56
    %p58 = scmp.ne.s32.totalorder %s50, %s52
    %p59 = scmp.eq.s32.totalorder %s21, 1
    %p60 = por %p58, %p59
    %p61 = scmp.ne.s32.totalorder %s52, %s53
    %p62 = scmp.eq.s32.totalorder %s21, 0
    %p63 = por %p61, %p62
    %p64 = scmp.ne.s32.totalorder %s52, %s53
    %p65 = scmp.eq.s32.totalorder %s22, 1
    %p66 = por %p64, %p65
    %p68 = scmp.ne.s32.totalorder %s53, %s67
    %p69 = scmp.eq.s32.totalorder %s22, 0
    %p70 = por %p68, %p69
    %s72 = sadd.s32 %s71, 1
    %p75 = scmp.eq.s32.totalorder %s16, 1
    %p76 = scmp.ne.s32.totalorder %s71, %s73
    %p77 = scmp.eq.s32.totalorder %s16, 0
    %p78 = por %p76, %p77
    %p79 = scmp.ne.s32.totalorder %s71, %s73
    %p80 = scmp.eq.s32.totalorder %s21, 1
    %p81 = por %p79, %p80
    %p82 = scmp.ne.s32.totalorder %s73, %s74
    %p83 = scmp.eq.s32.totalorder %s21, 0
    %p84 = por %p82, %p83
    %p85 = scmp.ne.s32.totalorder %s73, %s74
    %p86 = scmp.eq.s32.totalorder %s22, 1
    %p87 = por %p85, %p86
    %p89 = scmp.ne.s32.totalorder %s74, %s88
    %p90 = scmp.eq.s32.totalorder %s22, 0
    %p91 = por %p89, %p90
    %s93 = sadd.s32 %s92, 1
    %p96 = scmp.eq.s32.totalorder %s16, 1
    %p97 = scmp.ne.s32.totalorder %s92, %s94
    %p98 = scmp.eq.s32.totalorder %s16, 0
    %p99 = por %p97, %p98
    %p100 = scmp.ne.s32.totalorder %s92, %s94
    %p101 = scmp.eq.s32.totalorder %s21, 1
    %p102 = por %p100, %p101
    %p103 = scmp.ne.s32.totalorder %s94, %s95
    %p104 = scmp.eq.s32.totalorder %s21, 0
    %p105 = por %p103, %p104
    %p106 = scmp.ne.s32.totalorder %s94, %s95
    %p107 = scmp.eq.s32.totalorder %s22, 1
    %p108 = por %p106, %p107
    %p110 = scmp.ne.s32.totalorder %s95, %s109
    %p111 = scmp.eq.s32.totalorder %s22, 0
    %p112 = por %p110, %p111
    %s114 = sadd.s32 %s113, 1
    %p117 = scmp.eq.s32.totalorder %s16, 1
    %p118 = scmp.ne.s32.totalorder %s113, %s115
    %p119 = scmp.eq.s32.totalorder %s16, 0
    %p120 = por %p118, %p119
    %p121 = scmp.ne.s32.totalorder %s113, %s115
    %p122 = scmp.eq.s32.totalorder %s21, 1
    %p123 = por %p121, %p122
    %p124 = scmp.ne.s32.totalorder %s115, %s116
    %p125 = scmp.eq.s32.totalorder %s21, 0
    %p126 = por %p124, %p125
    %p127 = scmp.ne.s32.totalorder %s115, %s116
    %p128 = scmp.eq.s32.totalorder %s22, 1
    %p129 = por %p127, %p128
    %p131 = scmp.ne.s32.totalorder %s116, %s130
    %p132 = scmp.eq.s32.totalorder %s22, 0
    %p133 = por %p131, %p132
    %s135 = sadd.s32 %s134, 1
    %p138 = scmp.eq.s32.totalorder %s16, 1
    %p139 = scmp.ne.s32.totalorder %s134, %s136
    %p140 = scmp.eq.s32.totalorder %s16, 0
    %p141 = por %p139, %p140
    %p142 = scmp.ne.s32.totalorder %s134, %s136
    %p143 = scmp.eq.s32.totalorder %s21, 1
    %p144 = por %p142, %p143
    %p145 = scmp.ne.s32.totalorder %s136, %s137
    %p146 = scmp.eq.s32.totalorder %s21, 0
    %p147 = por %p145, %p146
    %p148 = scmp.ne.s32.totalorder %s136, %s137
    %p149 = scmp.eq.s32.totalorder %s22, 1
    %p150 = por %p148, %p149
    %p152 = scmp.ne.s32.totalorder %s137, %s151
    %p153 = scmp.eq.s32.totalorder %s22, 0
    %p154 = por %p152, %p153
    %s156 = sadd.s32 %s155, 1
    %p159 = scmp.eq.s32.totalorder %s16, 1
    %p160 = scmp.ne.s32.totalorder %s155, %s157
    %p161 = scmp.eq.s32.totalorder %s16, 0
    %p162 = por %p160, %p161
    %p163 = scmp.ne.s32.totalorder %s155, %s157
    %p164 = scmp.eq.s32.totalorder %s21, 1
    %p165 = por %p163, %p164
    %p166 = scmp.ne.s32.totalorder %s157, %s158
    %p167 = scmp.eq.s32.totalorder %s21, 0
    %p168 = por %p166, %p167
    %p169 = scmp.ne.s32.totalorder %s157, %s158
    %p170 = scmp.eq.s32.totalorder %s22, 1
    %p171 = por %p169, %p170
    %p173 = scmp.ne.s32.totalorder %s158, %s172
    %p174 = scmp.eq.s32.totalorder %s22, 0
    %p175 = por %p173, %p174
    %s177 = sadd.s32 %s176, 1
    %p180 = scmp.eq.s32.totalorder %s16, 1
    %p181 = scmp.ne.s32.totalorder %s176, %s178
    %p182 = scmp.eq.s32.totalorder %s16, 0
    %p183 = por %p181, %p182
    %p184 = scmp.ne.s32.totalorder %s176, %s178
    %p185 = scmp.eq.s32.totalorder %s21, 1
    %p186 = por %p184, %p185
    %p187 = scmp.ne.s32.totalorder %s178, %s179
    %p188 = scmp.eq.s32.totalorder %s21, 0
    %p189 = por %p187, %p188
    %p190 = scmp.ne.s32.totalorder %s178, %s179
    %p191 = scmp.eq.s32.totalorder %s22, 1
    %p192 = por %p190, %p191
    %p194 = scmp.ne.s32.totalorder %s179, %s193
    %p195 = scmp.eq.s32.totalorder %s22, 0
    %p196 = por %p194, %p195
    %s198 = sadd.s32 %s197, 1
    %p201 = scmp.eq.s32.totalorder %s16, 1
    %p202 = scmp.ne.s32.totalorder %s197, %s199
    %p203 = scmp.eq.s32.totalorder %s16, 0
    %p204 = por %p202, %p203
    %p205 = scmp.ne.s32.totalorder %s197, %s199
    %p206 = scmp.eq.s32.totalorder %s21, 1
    %p207 = por %p205, %p206
    %p208 = scmp.ne.s32.totalorder %s199, %s200
    %p209 = scmp.eq.s32.totalorder %s21, 0
    %p210 = por %p208, %p209
    %p211 = scmp.ne.s32.totalorder %s199, %s200
    %p212 = scmp.eq.s32.totalorder %s22, 1
    %p213 = por %p211, %p212
    %p215 = scmp.ne.s32.totalorder %s200, %s214
    %p216 = scmp.eq.s32.totalorder %s22, 0
    %p217 = por %p215, %p216
    %s219 = sadd.s32 %s218, 1
    %p222 = scmp.eq.s32.totalorder %s16, 1
    %p223 = scmp.ne.s32.totalorder %s218, %s220
    %p224 = scmp.eq.s32.totalorder %s16, 0
    %p225 = por %p223, %p224
    %p226 = scmp.ne.s32.totalorder %s218, %s220
    %p227 = scmp.eq.s32.totalorder %s21, 1
    %p228 = por %p226, %p227
    %p229 = scmp.ne.s32.totalorder %s220, %s221
    %p230 = scmp.eq.s32.totalorder %s21, 0
    %p231 = por %p229, %p230
    %p232 = scmp.ne.s32.totalorder %s220, %s221
    %p233 = scmp.eq.s32.totalorder %s22, 1
    %p234 = por %p232, %p233
    %p236 = scmp.ne.s32.totalorder %s221, %s235
    %p237 = scmp.eq.s32.totalorder %s22, 0
    %p238 = por %p236, %p237
    %s239 = ssub.s32 %s16, %s23
    %p240 = scmp.eq.s32.totalorder %s239, 0
    %s242 = sadd.s32 %s241, 1
    %s243 = scalar_select %p240, %s241, %s242
    %p246 = pneg %p240
    %p247 = scmp.eq.s32.totalorder %s16, 1
    %p248 = por %p246, %p247
    %p249 = scmp.ne.s32.totalorder %s241, %s244
    %p250 = scmp.eq.s32.totalorder %s16, 0
    %p251 = por %p249, %p250
    %p252 = scmp.ne.s32.totalorder %s241, %s244
    %p253 = scmp.eq.s32.totalorder %s21, 1
    %p254 = por %p252, %p253
    %p255 = scmp.ne.s32.totalorder %s244, %s245
    %p256 = scmp.eq.s32.totalorder %s21, 0
    %p257 = por %p255, %p256
    %p258 = scmp.ne.s32.totalorder %s244, %s245
    %p259 = scmp.eq.s32.totalorder %s22, 1
    %p260 = por %p258, %p259
    %p262 = scmp.ne.s32.totalorder %s245, %s261
    %p263 = scmp.eq.s32.totalorder %s22, 0
    %p264 = por %p262, %p263
    %p265 = scmp.le.s32.totalorder 1, %s16
    %p266 = scmp.lt.s32.totalorder %s16, 3
    %p267 = pnand %p265, %p266
    %p268 = pneg %p267
    // Predicated region
    $region9: #{tpu_custom_call.1} parent=5 // pred_check
      _
    $region10: #{tpu_custom_call.1} parent=5 // pred_check_branch
      %270 = sbr.rel (%p267) target = $region12
    $region11: #{tpu_custom_call.1} parent=5 // pred_region
      %s271 = ssub.s32 %s16, 1
      // Predicated region
      $region13: #{tpu_custom_call.1} parent=11 // pred_check
        %p272 = pneg %p63
      $region14: #{tpu_custom_call.1} parent=11 // pred_check_branch
        %274 = sbr.rel (%p272) target = $region16
      $region15: #{tpu_custom_call.1} parent=11 // pred_region
        _
      $region16: #{tpu_custom_call.1} parent=11 // pred_fallthru
        _
      // Predicated region
      $region17: #{tpu_custom_call.1} parent=11 // pred_check
        %p275 = pneg %p84
      $region18: #{tpu_custom_call.1} parent=11 // pred_check_branch
        %277 = sbr.rel (%p275) target = $region20
      $region19: #{tpu_custom_call.1} parent=11 // pred_region
        _
      $region20: #{tpu_custom_call.1} parent=11 // pred_fallthru
        _
      // Predicated region
      $region21: #{tpu_custom_call.1} parent=11 // pred_check
        %p278 = pneg %p105
      $region22: #{tpu_custom_call.1} parent=11 // pred_check_branch
        %280 = sbr.rel (%p278) target = $region24
      $region23: #{tpu_custom_call.1} parent=11 // pred_region
        _
      $region24: #{tpu_custom_call.1} parent=11 // pred_fallthru
        _
      // Predicated region
      $region25: #{tpu_custom_call.1} parent=11 // pred_check
        %p281 = pneg %p126
      $region26: #{tpu_custom_call.1} parent=11 // pred_check_branch
        %283 = sbr.rel (%p281) target = $region28
      $region27: #{tpu_custom_call.1} parent=11 // pred_region
        _
      $region28: #{tpu_custom_call.1} parent=11 // pred_fallthru
        _
      // Predicated region
      $region29: #{tpu_custom_call.1} parent=11 // pred_check
        %p284 = pneg %p147
      $region30: #{tpu_custom_call.1} parent=11 // pred_check_branch
        %286 = sbr.rel (%p284) target = $region32
      $region31: #{tpu_custom_call.1} parent=11 // pred_region
        _
      $region32: #{tpu_custom_call.1} parent=11 // pred_fallthru
        _
      // Predicated region
      $region33: #{tpu_custom_call.1} parent=11 // pred_check
        %p287 = pneg %p168
      $region34: #{tpu_custom_call.1} parent=11 // pred_check_branch
        %289 = sbr.rel (%p287) target = $region36
      $region35: #{tpu_custom_call.1} parent=11 // pred_region
        _
      $region36: #{tpu_custom_call.1} parent=11 // pred_fallthru
        _
      // Predicated region
      $region37: #{tpu_custom_call.1} parent=11 // pred_check
        %p290 = pneg %p189
      $region38: #{tpu_custom_call.1} parent=11 // pred_check_branch
        %292 = sbr.rel (%p290) target = $region40
      $region39: #{tpu_custom_call.1} parent=11 // pred_region
        _
      $region40: #{tpu_custom_call.1} parent=11 // pred_fallthru
        _
      // Predicated region
      $region41: #{tpu_custom_call.1} parent=11 // pred_check
        %p293 = pneg %p210
      $region42: #{tpu_custom_call.1} parent=11 // pred_check_branch
        %295 = sbr.rel (%p293) target = $region44
      $region43: #{tpu_custom_call.1} parent=11 // pred_region
        _
      $region44: #{tpu_custom_call.1} parent=11 // pred_fallthru
        _
      // Predicated region
      $region45: #{tpu_custom_call.1} parent=11 // pred_check
        %p296 = pneg %p231
      $region46: #{tpu_custom_call.1} parent=11 // pred_check_branch
        %298 = sbr.rel (%p296) target = $region48
      $region47: #{tpu_custom_call.1} parent=11 // pred_region
        _
      $region48: #{tpu_custom_call.1} parent=11 // pred_fallthru
        _
    $region12: #{tpu_custom_call.1} parent=5 // pred_fallthru
      _
    %p299 = scmp.lt.s32.totalorder %s16, 2
    // Predicated region
    $region49: #{tpu_custom_call.1} parent=5 // pred_check
      %p300 = pneg %p299
    $region50: #{tpu_custom_call.1} parent=5 // pred_check_branch
      %302 = sbr.rel (%p300) target = $region52
    $region51: #{tpu_custom_call.1} parent=5 // pred_region
      // Predicated region
      $region53: #{tpu_custom_call.1} parent=51 // pred_check
        %p303 = pneg %p36
      $region54: #{tpu_custom_call.1} parent=51 // pred_check_branch
        %305 = sbr.rel (%p303) target = $region56
      $region55: #{tpu_custom_call.1} parent=51 // pred_region
        %p306 = scmp.lt.s32.totalorder %s16, 1
        %s307 = scalar_select %p306, %s16, 1
        %s308 = smul.addr %s307, 32
        %s309 = smul.addr %s308, 8
        %s310 = scalar_lea.vmem %s0, %s309
      $region56: #{tpu_custom_call.1} parent=51 // pred_fallthru
        _
    $region52: #{tpu_custom_call.1} parent=5 // pred_fallthru
      _
    %p311 = scmp.le.s32.totalorder 1, %s16
    %p312 = scmp.lt.s32.totalorder %s16, 3
    %p313 = pnand %p311, %p312
    %p314 = pneg %p313
    // Predicated region
    $region57: #{tpu_custom_call.1} parent=5 // pred_check
      _
    $region58: #{tpu_custom_call.1} parent=5 // pred_check_branch
      %316 = sbr.rel (%p313) target = $region60
    $region59: #{tpu_custom_call.1} parent=5 // pred_region
      %s317 = ssub.s32 %s16, 1
      %p318 = scmp.lt.s32.totalorder %s21, 1
      %s319 = scalar_select %p318, %s21, 1
      %s320 = smul.addr %s319, 32
      %s321 = smul.addr %s320, 8
      %s322 = scalar_lea.vmem %s0, %s321
      %p323 = pneg %p42
      %p324 = pneg %p39
      %p325 = pneg %p63
      %p326 = pneg %p60
      %p327 = pneg %p84
      %p328 = pneg %p81
      %p329 = pneg %p105
      %p330 = pneg %p102
      %p331 = pneg %p126
      %p332 = pneg %p123
      %p333 = pneg %p147
      %p334 = pneg %p144
      %p335 = pneg %p168
      %p336 = pneg %p165
      %p337 = pneg %p189
      %p338 = pneg %p186
      %p339 = pneg %p210
      %p340 = pneg %p207
      %p341 = pneg %p231
      %p342 = pneg %p228
      %p343 = pneg %p257
      %p344 = pneg %p254
      %p345 = scmp.lt.s32.totalorder %s21, 1
      %s346 = scalar_select %p345, %s21, 1
      %s347 = smul.addr %s346, 32
      %s348 = smul.addr %s347, 8
      %s349 = scalar_lea.vmem %s10, %s348
      %p350 = scmp.lt.s32.totalorder %s21, 1
      %s351 = scalar_select %p350, %s21, 1
      %s352 = smul.addr %s351, 32
      %s353 = smul.addr %s352, 8
      %s354 = scalar_lea.vmem %s0, %s353
      %p355 = scmp.lt.s32.totalorder %s21, 1
      %s356 = scalar_select %p355, %s21, 1
      %s357 = smul.addr %s356, 32
      %s358 = smul.addr %s357, 8
      %s359 = scalar_lea.vmem %s10, %s358
      %v361 = vld [vmem:[%s354] sm:$0xff]
      %v362 = vld [vmem:[%s354 + $0x8] sm:$0xff]
      %v363 = vld [vmem:[%s354 + $0x10] sm:$0xff]
      %v364 = vld [vmem:[%s354 + $0x18] sm:$0xff]
      %v365 = vld [vmem:[%s354 + $0x20] sm:$0xff]
      %v366 = vld [vmem:[%s354 + $0x28] sm:$0xff]
      %v367 = vld [vmem:[%s354 + $0x30] sm:$0xff]
      %v368 = vld [vmem:[%s354 + $0x38] sm:$0xff]
      %v369 = vld [vmem:[%s354 + $0x40] sm:$0xff]
      %v370 = vld [vmem:[%s354 + $0x48] sm:$0xff]
      %v371 = vld [vmem:[%s354 + $0x50] sm:$0xff]
      %v372 = vld [vmem:[%s354 + $0x58] sm:$0xff]
      %v373 = vld [vmem:[%s354 + $0x60] sm:$0xff]
      %v374 = vld [vmem:[%s354 + $0x68] sm:$0xff]
      %v375 = vld [vmem:[%s354 + $0x70] sm:$0xff]
      %v376 = vld [vmem:[%s354 + $0x78] sm:$0xff]
      %v377 = vld [vmem:[%s354 + $0x80] sm:$0xff]
      %v378 = vld [vmem:[%s354 + $0x88] sm:$0xff]
      %v379 = vld [vmem:[%s354 + $0x90] sm:$0xff]
      %v380 = vld [vmem:[%s354 + $0x98] sm:$0xff]
      %v381 = vld [vmem:[%s354 + $0xa0] sm:$0xff]
      %v382 = vld [vmem:[%s354 + $0xa8] sm:$0xff]
      %v383 = vld [vmem:[%s354 + $0xb0] sm:$0xff]
      %v384 = vld [vmem:[%s354 + $0xb8] sm:$0xff]
      %v385 = vld [vmem:[%s354 + $0xc0] sm:$0xff]
      %v386 = vld [vmem:[%s354 + $0xc8] sm:$0xff]
      %v387 = vld [vmem:[%s354 + $0xd0] sm:$0xff]
      %v388 = vld [vmem:[%s354 + $0xd8] sm:$0xff]
      %v389 = vld [vmem:[%s354 + $0xe0] sm:$0xff]
      %v390 = vld [vmem:[%s354 + $0xe8] sm:$0xff]
      %v391 = vld [vmem:[%s354 + $0xf0] sm:$0xff]
      %v392 = vld [vmem:[%s354 + $0xf8] sm:$0xff]
      %v393 = vpack.c.bf16 %v362, %v361
      %v394 = vpack.c.bf16 %v364, %v363
      %v395 = vpack.c.bf16 %v366, %v365
      %v396 = vpack.c.bf16 %v368, %v367
      %v397 = vpack.c.bf16 %v370, %v369
      %v398 = vpack.c.bf16 %v372, %v371
      %v399 = vpack.c.bf16 %v374, %v373
      %v400 = vpack.c.bf16 %v376, %v375
      %v401 = vpack.c.bf16 %v378, %v377
      %v402 = vpack.c.bf16 %v380, %v379
      %v403 = vpack.c.bf16 %v382, %v381
      %v404 = vpack.c.bf16 %v384, %v383
      %v405 = vpack.c.bf16 %v386, %v385
      %v406 = vpack.c.bf16 %v388, %v387
      %v407 = vpack.c.bf16 %v390, %v389
      %v408 = vpack.c.bf16 %v392, %v391
      %v409 = vld [vmem:[%s1] sm:$0xf]
      %v410 = vld [vmem:[%s1 + $0x4] sm:$0xf]
      %v413 = vunpack.c.l.b16 %v409
      %v414 = vunpack.c.l.b16 %v410
      %v415 = vpack.c.b16 %v414, %v413
      %vm417 = vcmask 130048
      %v419 = vsel %vm417, %v393, 0
      %v422 = vsel %vm417, %v394, 0
      %v425 = vsel %vm417, %v395, 0
      %v428 = vsel %vm417, %v396, 0
      %v431 = vsel %vm417, %v397, 0
      %v434 = vsel %vm417, %v398, 0
      %v437 = vsel %vm417, %v399, 0
      %v440 = vsel %vm417, %v400, 0
      %v443 = vsel %vm417, %v401, 0
      %v446 = vsel %vm417, %v402, 0
      %v449 = vsel %vm417, %v403, 0
      %v452 = vsel %vm417, %v404, 0
      %v455 = vsel %vm417, %v405, 0
      %v458 = vsel %vm417, %v406, 0
      %v461 = vsel %vm417, %v407, 0
      %v464 = vsel %vm417, %v408, 0
      %466 = vmatprep.subr.bf16.mxu0 0
      %467 = vmatpush1.bf16.msra.mxu0 0
      %468 = vmatprep.subr.bf16.mxu0 0
      %469 = vmatpush1.bf16.msra.mxu0 0
      %470 = vmatprep.subr.bf16.mxu0 0
      %471 = vmatpush1.bf16.msra.mxu0 0
      %472 = vmatprep.subr.bf16.mxu0 0
      %473 = vmatpush1.bf16.msra.mxu0 0
      %474 = vmatprep.subr.bf16.mxu0 0
      %475 = vmatpush1.bf16.msra.mxu0 0
      %476 = vmatprep.subr.bf16.mxu0 0
      %477 = vmatpush1.bf16.msra.mxu0 0
      %478 = vmatprep.subr.bf16.mxu0 0
      %479 = vmatpush1.bf16.msra.mxu0 0
      %480 = vmatprep.subr.bf16.mxu0 0
      %481 = vmatpush1.bf16.msra.mxu0 %v415
      %482 = vmatprep.subr.bf16.mxu0 0
      %483 = vmatpush2.bf16.msra.mxu0 0
      %484 = vmatprep.subr.bf16.mxu0 0
      %485 = vmatpush2.bf16.msra.mxu0 0
      %486 = vmatprep.subr.bf16.mxu0 0
      %487 = vmatpush2.bf16.msra.mxu0 0
      %488 = vmatprep.subr.bf16.mxu0 0
      %489 = vmatpush2.bf16.msra.mxu0 0
      %490 = vmatprep.subr.bf16.mxu0 0
      %491 = vmatpush2.bf16.msra.mxu0 0
      %492 = vmatprep.subr.bf16.mxu0 0
      %493 = vmatpush2.bf16.msra.mxu0 0
      %494 = vmatprep.subr.bf16.mxu0 0
      %495 = vmatpush2.bf16.msra.mxu0 0
      %496 = vmatprep.subr.bf16.mxu0 0
      %497 = vmatpush2.bf16.msra.mxu0 0
      %498 = vmatprep.mubr.bf16.mxu0 0
      %499 = vmatmul.mubr.bf16.gmra.mxu0 %v419
      %v500 = vpop.f32.mrf.mxu0
      %v501 = vadd.f32 0.0, %v500
      %v502 = vpop.f32.mrf.mxu0
      %v503 = vpop.f32.mrf.mxu0
      %v504 = vadd.f32 0.0, %v503
      %v505 = vpop.f32.mrf.mxu0
      %506 = vmatprep.mubr.bf16.mxu0 0
      %507 = vmatmul.mubr.bf16.gmra.mxu0 %v422
      %v508 = vpop.f32.mrf.mxu0
      %v509 = vadd.f32 0.0, %v508
      %v510 = vpop.f32.mrf.mxu0
      %v511 = vpop.f32.mrf.mxu0
      %v512 = vadd.f32 0.0, %v511
      %v513 = vpop.f32.mrf.mxu0
      %514 = vmatprep.mubr.bf16.mxu0 0
      %515 = vmatmul.mubr.bf16.gmra.mxu0 %v425
      %v516 = vpop.f32.mrf.mxu0
      %v517 = vadd.f32 0.0, %v516
      %v518 = vpop.f32.mrf.mxu0
      %v519 = vpop.f32.mrf.mxu0
      %v520 = vadd.f32 0.0, %v519
      %v521 = vpop.f32.mrf.mxu0
      %522 = vmatprep.mubr.bf16.mxu0 0
      %523 = vmatmul.mubr.bf16.gmra.mxu0 %v428
      %v524 = vpop.f32.mrf.mxu0
      %v525 = vadd.f32 0.0, %v524
      %v526 = vpop.f32.mrf.mxu0
      %v527 = vpop.f32.mrf.mxu0
      %v528 = vadd.f32 0.0, %v527
      %v529 = vpop.f32.mrf.mxu0
      %530 = vmatprep.mubr.bf16.mxu0 0
      %531 = vmatmul.mubr.bf16.gmra.mxu0 %v431
      %v532 = vpop.f32.mrf.mxu0
      %v533 = vadd.f32 0.0, %v532
      %v534 = vpop.f32.mrf.mxu0
      %v535 = vpop.f32.mrf.mxu0
      %v536 = vadd.f32 0.0, %v535
      %v537 = vpop.f32.mrf.mxu0
      %538 = vmatprep.mubr.bf16.mxu0 0
      %539 = vmatmul.mubr.bf16.gmra.mxu0 %v434
      %v540 = vpop.f32.mrf.mxu0
      %v541 = vadd.f32 0.0, %v540
      %v542 = vpop.f32.mrf.mxu0
      %v543 = vpop.f32.mrf.mxu0
      %v544 = vadd.f32 0.0, %v543
      %v545 = vpop.f32.mrf.mxu0
      %546 = vmatprep.mubr.bf16.mxu0 0
      %547 = vmatmul.mubr.bf16.gmra.mxu0 %v437
      %v548 = vpop.f32.mrf.mxu0
      %v549 = vadd.f32 0.0, %v548
      %v550 = vpop.f32.mrf.mxu0
      %v551 = vpop.f32.mrf.mxu0
      %v552 = vadd.f32 0.0, %v551
      %v553 = vpop.f32.mrf.mxu0
      %554 = vmatprep.mubr.bf16.mxu0 0
      %555 = vmatmul.mubr.bf16.gmra.mxu0 %v440
      %v556 = vpop.f32.mrf.mxu0
      %v557 = vadd.f32 0.0, %v556
      %v558 = vpop.f32.mrf.mxu0
      %v559 = vpop.f32.mrf.mxu0
      %v560 = vadd.f32 0.0, %v559
      %v561 = vpop.f32.mrf.mxu0
      %562 = vmatprep.mubr.bf16.mxu0 0
      %563 = vmatmul.mubr.bf16.gmra.mxu0 %v443
      %v564 = vpop.f32.mrf.mxu0
      %v565 = vadd.f32 0.0, %v564
      %v566 = vpop.f32.mrf.mxu0
      %v567 = vpop.f32.mrf.mxu0
      %v568 = vadd.f32 0.0, %v567
      %v569 = vpop.f32.mrf.mxu0
      %570 = vmatprep.mubr.bf16.mxu0 0
      %571 = vmatmul.mubr.bf16.gmra.mxu0 %v446
      %v572 = vpop.f32.mrf.mxu0
      %v573 = vadd.f32 0.0, %v572
      %v574 = vpop.f32.mrf.mxu0
      %v575 = vpop.f32.mrf.mxu0
      %v576 = vadd.f32 0.0, %v575
      %v577 = vpop.f32.mrf.mxu0
      %578 = vmatprep.mubr.bf16.mxu0 0
      %579 = vmatmul.mubr.bf16.gmra.mxu0 %v449
      %v580 = vpop.f32.mrf.mxu0
      %v581 = vadd.f32 0.0, %v580
      %v582 = vpop.f32.mrf.mxu0
      %v583 = vpop.f32.mrf.mxu0
      %v584 = vadd.f32 0.0, %v583
      %v585 = vpop.f32.mrf.mxu0
      %586 = vmatprep.mubr.bf16.mxu0 0
      %587 = vmatmul.mubr.bf16.gmra.mxu0 %v452
      %v588 = vpop.f32.mrf.mxu0
      %v589 = vadd.f32 0.0, %v588
      %v590 = vpop.f32.mrf.mxu0
      %v591 = vpop.f32.mrf.mxu0
      %v592 = vadd.f32 0.0, %v591
      %v593 = vpop.f32.mrf.mxu0
      %594 = vmatprep.mubr.bf16.mxu0 0
      %595 = vmatmul.mubr.bf16.gmra.mxu0 %v455
      %v596 = vpop.f32.mrf.mxu0
      %v597 = vadd.f32 0.0, %v596
      %v598 = vpop.f32.mrf.mxu0
      %v599 = vpop.f32.mrf.mxu0
      %v600 = vadd.f32 0.0, %v599
      %v601 = vpop.f32.mrf.mxu0
      %602 = vmatprep.mubr.bf16.mxu0 0
      %603 = vmatmul.mubr.bf16.gmra.mxu0 %v458
      %v604 = vpop.f32.mrf.mxu0
      %v605 = vadd.f32 0.0, %v604
      %v606 = vpop.f32.mrf.mxu0
      %v607 = vpop.f32.mrf.mxu0
      %v608 = vadd.f32 0.0, %v607
      %v609 = vpop.f32.mrf.mxu0
      %610 = vmatprep.mubr.bf16.mxu0 0
      %611 = vmatmul.mubr.bf16.gmra.mxu0 %v461
      %v612 = vpop.f32.mrf.mxu0
      %v613 = vadd.f32 0.0, %v612
      %v614 = vpop.f32.mrf.mxu0
      %v615 = vpop.f32.mrf.mxu0
      %v616 = vadd.f32 0.0, %v615
      %v617 = vpop.f32.mrf.mxu0
      %618 = vmatprep.mubr.bf16.mxu0 0
      %619 = vmatmul.mubr.bf16.gmra.mxu0 %v464
      %v620 = vpop.f32.mrf.mxu0
      %v621 = vadd.f32 0.0, %v620
      %v622 = vpop.f32.mrf.mxu0
      %v623 = vpop.f32.mrf.mxu0
      %v624 = vadd.f32 0.0, %v623
      %v625 = vpop.f32.mrf.mxu0
      %626 = vdwg.mxu0
      %v627 = vld [vmem:[%s2] sm:$0x1]
      %v629 = vlaneseq
      %v630 = vshrl.u32 %v629, 7
      %v631 = vsub.s32 0, %v630
      %v632 = vrot.slane %v627, %v631
      %v634 = vmul.f32 %v501, %v632
      %v635 = vmul.f32 %v504, %v632
      %v636 = vmul.f32 %v509, %v632
      %v637 = vmul.f32 %v512, %v632
      %v638 = vmul.f32 %v517, %v632
      %v639 = vmul.f32 %v520, %v632
      %v640 = vmul.f32 %v525, %v632
      %v641 = vmul.f32 %v528, %v632
      %v642 = vmul.f32 %v533, %v632
      %v643 = vmul.f32 %v536, %v632
      %v644 = vmul.f32 %v541, %v632
      %v645 = vmul.f32 %v544, %v632
      %v646 = vmul.f32 %v549, %v632
      %v647 = vmul.f32 %v552, %v632
      %v648 = vmul.f32 %v557, %v632
      %v649 = vmul.f32 %v560, %v632
      %v650 = vmul.f32 %v565, %v632
      %v651 = vmul.f32 %v568, %v632
      %v652 = vmul.f32 %v573, %v632
      %v653 = vmul.f32 %v576, %v632
      %v654 = vmul.f32 %v581, %v632
      %v655 = vmul.f32 %v584, %v632
      %v656 = vmul.f32 %v589, %v632
      %v657 = vmul.f32 %v592, %v632
      %v658 = vmul.f32 %v597, %v632
      %v659 = vmul.f32 %v600, %v632
      %v660 = vmul.f32 %v605, %v632
      %v661 = vmul.f32 %v608, %v632
      %v662 = vmul.f32 %v613, %v632
      %v663 = vmul.f32 %v616, %v632
      %v664 = vmul.f32 %v621, %v632
      %v665 = vmul.f32 %v624, %v632
      %v666 = vld [vmem:[%s3] sm:$0x1]
      %v668 = vlaneseq
      %v669 = vshrl.u32 %v668, 7
      %v670 = vsub.s32 0, %v669
      %v671 = vrot.slane %v666, %v670
      %v673 = vadd.f32 %v634, %v671
      %v674 = vadd.f32 %v635, %v671
      %v675 = vadd.f32 %v636, %v671
      %v676 = vadd.f32 %v637, %v671
      %v677 = vadd.f32 %v638, %v671
      %v678 = vadd.f32 %v639, %v671
      %v679 = vadd.f32 %v640, %v671
      %v680 = vadd.f32 %v641, %v671
      %v681 = vadd.f32 %v642, %v671
      %v682 = vadd.f32 %v643, %v671
      %v683 = vadd.f32 %v644, %v671
      %v684 = vadd.f32 %v645, %v671
      %v685 = vadd.f32 %v646, %v671
      %v686 = vadd.f32 %v647, %v671
      %v687 = vadd.f32 %v648, %v671
      %v688 = vadd.f32 %v649, %v671
      %v689 = vadd.f32 %v650, %v671
      %v690 = vadd.f32 %v651, %v671
      %v691 = vadd.f32 %v652, %v671
      %v692 = vadd.f32 %v653, %v671
      %v693 = vadd.f32 %v654, %v671
      %v694 = vadd.f32 %v655, %v671
      %v695 = vadd.f32 %v656, %v671
      %v696 = vadd.f32 %v657, %v671
      %v697 = vadd.f32 %v658, %v671
      %v698 = vadd.f32 %v659, %v671
      %v699 = vadd.f32 %v660, %v671
      %v700 = vadd.f32 %v661, %v671
      %v701 = vadd.f32 %v662, %v671
      %v702 = vadd.f32 %v663, %v671
      %v703 = vadd.f32 %v664, %v671
      %v704 = vadd.f32 %v665, %v671
      %v705 = vmax.f32 %v673, 0.0
      %v706 = vmax.f32 %v674, 0.0
      %v707 = vmax.f32 %v675, 0.0
      %v708 = vmax.f32 %v676, 0.0
      %v709 = vmax.f32 %v677, 0.0
      %v710 = vmax.f32 %v678, 0.0
      %v711 = vmax.f32 %v679, 0.0
      %v712 = vmax.f32 %v680, 0.0
      %v713 = vmax.f32 %v681, 0.0
      %v714 = vmax.f32 %v682, 0.0
      %v715 = vmax.f32 %v683, 0.0
      %v716 = vmax.f32 %v684, 0.0
      %v717 = vmax.f32 %v685, 0.0
      %v718 = vmax.f32 %v686, 0.0
      %v719 = vmax.f32 %v687, 0.0
      %v720 = vmax.f32 %v688, 0.0
      %v721 = vmax.f32 %v689, 0.0
      %v722 = vmax.f32 %v690, 0.0
      %v723 = vmax.f32 %v691, 0.0
      %v724 = vmax.f32 %v692, 0.0
      %v725 = vmax.f32 %v693, 0.0
      %v726 = vmax.f32 %v694, 0.0
      %v727 = vmax.f32 %v695, 0.0
      %v728 = vmax.f32 %v696, 0.0
      %v729 = vmax.f32 %v697, 0.0
      %v730 = vmax.f32 %v698, 0.0
      %v731 = vmax.f32 %v699, 0.0
      %v732 = vmax.f32 %v700, 0.0
      %v733 = vmax.f32 %v701, 0.0
      %v734 = vmax.f32 %v702, 0.0
      %v735 = vmax.f32 %v703, 0.0
      %v736 = vmax.f32 %v704, 0.0
      %vm737 = vcmask 31744
      %738 = vst.msk [vmem:[#allocation2] sm:$0xff] %vm737, 0.0
      %739 = vst.msk [vmem:[#allocation2 + $0x8] sm:$0xff] %vm737, 0.0
      %vm740 = vcmask 25600
      %741 = vst.msk [vmem:[#allocation2 + $0x10] sm:$0x3] %vm740, 0.0
      %s742 = scalar_lea.vmem [#allocation2], 408
      %743 = vst.msk [vmem:[%s742] sm:$0xff] %vm737, 0.0
      %744 = vst.msk [vmem:[%s742 + $0x8] sm:$0xff] %vm737, 0.0
      %745 = vst.msk [vmem:[%s742 + $0x10] sm:$0x3] %vm740, 0.0
      %vm746 = vcmask 24576
      %747 = vst.msk [vmem:[#allocation2] sm:$0x1] %vm746, 0.0
      %748 = vst.msk [vmem:[#allocation2 + $0x18] sm:$0x1] %vm746, 0.0
      %749 = vst.msk [vmem:[#allocation2 + $0x30] sm:$0x1] %vm746, 0.0
      %750 = vst.msk [vmem:[#allocation2 + $0x48] sm:$0x1] %vm746, 0.0
      %751 = vst.msk [vmem:[#allocation2 + $0x60] sm:$0x1] %vm746, 0.0
      %752 = vst.msk [vmem:[#allocation2 + $0x78] sm:$0x1] %vm746, 0.0
      %753 = vst.msk [vmem:[#allocation2 + $0x90] sm:$0x1] %vm746, 0.0
      %754 = vst.msk [vmem:[#allocation2 + $0xa8] sm:$0x1] %vm746, 0.0
      %755 = vst.msk [vmem:[#allocation2 + $0xc0] sm:$0x1] %vm746, 0.0
      %756 = vst.msk [vmem:[#allocation2 + $0xd8] sm:$0x1] %vm746, 0.0
      %757 = vst.msk [vmem:[#allocation2 + $0xf0] sm:$0x1] %vm746, 0.0
      %758 = vst.msk [vmem:[#allocation2 + $0x108] sm:$0x1] %vm746, 0.0
      %759 = vst.msk [vmem:[#allocation2 + $0x120] sm:$0x1] %vm746, 0.0
      %760 = vst.msk [vmem:[#allocation2 + $0x138] sm:$0x1] %vm746, 0.0
      %761 = vst.msk [vmem:[#allocation2 + $0x150] sm:$0x1] %vm746, 0.0
      %762 = vst.msk [vmem:[#allocation2 + $0x168] sm:$0x1] %vm746, 0.0
      %763 = vst.msk [vmem:[#allocation2 + $0x180] sm:$0x1] %vm746, 0.0
      %764 = vst.msk [vmem:[#allocation2 + $0x198] sm:$0x1] %vm746, 0.0
      %765 = vst.msk [vmem:[#allocation2 + $0x11] sm:$0x1] %vm746, 0.0
      %766 = vst.msk [vmem:[#allocation2 + $0x29] sm:$0x1] %vm746, 0.0
      %767 = vst.msk [vmem:[#allocation2 + $0x41] sm:$0x1] %vm746, 0.0
      %768 = vst.msk [vmem:[#allocation2 + $0x59] sm:$0x1] %vm746, 0.0
      %769 = vst.msk [vmem:[#allocation2 + $0x71] sm:$0x1] %vm746, 0.0
      %770 = vst.msk [vmem:[#allocation2 + $0x89] sm:$0x1] %vm746, 0.0
      %771 = vst.msk [vmem:[#allocation2 + $0xa1] sm:$0x1] %vm746, 0.0
      %772 = vst.msk [vmem:[#allocation2 + $0xb9] sm:$0x1] %vm746, 0.0
      %773 = vst.msk [vmem:[#allocation2 + $0xd1] sm:$0x1] %vm746, 0.0
      %774 = vst.msk [vmem:[#allocation2 + $0xe9] sm:$0x1] %vm746, 0.0
      %775 = vst.msk [vmem:[#allocation2 + $0x101] sm:$0x1] %vm746, 0.0
      %776 = vst.msk [vmem:[#allocation2 + $0x119] sm:$0x1] %vm746, 0.0
      %777 = vst.msk [vmem:[#allocation2 + $0x131] sm:$0x1] %vm746, 0.0
      %778 = vst.msk [vmem:[#allocation2 + $0x149] sm:$0x1] %vm746, 0.0
      %779 = vst.msk [vmem:[#allocation2 + $0x161] sm:$0x1] %vm746, 0.0
      %780 = vst.msk [vmem:[#allocation2 + $0x179] sm:$0x1] %vm746, 0.0
      %781 = vst.msk [vmem:[#allocation2 + $0x191] sm:$0x1] %vm746, 0.0
      %782 = vst.msk [vmem:[#allocation2 + $0x1a9] sm:$0x1] %vm746, 0.0
      %s783 = scalar_lea.vmem [#allocation2], 24
      %784 = vst.msk [vmem:[%s783 + $0x1] sm:$0xff] %vm737, %v705
      %785 = vst.msk [vmem:[%s783 + $0x9] sm:$0xff] %vm737, %v706
      %786 = vst.msk [vmem:[%s783 + $0x19] sm:$0xff] %vm737, %v707
      %787 = vst.msk [vmem:[%s783 + $0x21] sm:$0xff] %vm737, %v708
      %788 = vst.msk [vmem:[%s783 + $0x31] sm:$0xff] %vm737, %v709
      %789 = vst.msk [vmem:[%s783 + $0x39] sm:$0xff] %vm737, %v710
      %790 = vst.msk [vmem:[%s783 + $0x49] sm:$0xff] %vm737, %v711
      %791 = vst.msk [vmem:[%s783 + $0x51] sm:$0xff] %vm737, %v712
      %792 = vst.msk [vmem:[%s783 + $0x61] sm:$0xff] %vm737, %v713
      %793 = vst.msk [vmem:[%s783 + $0x69] sm:$0xff] %vm737, %v714
      %794 = vst.msk [vmem:[%s783 + $0x79] sm:$0xff] %vm737, %v715
      %795 = vst.msk [vmem:[%s783 + $0x81] sm:$0xff] %vm737, %v716
      %796 = vst.msk [vmem:[%s783 + $0x91] sm:$0xff] %vm737, %v717
      %797 = vst.msk [vmem:[%s783 + $0x99] sm:$0xff] %vm737, %v718
      %798 = vst.msk [vmem:[%s783 + $0xa9] sm:$0xff] %vm737, %v719
      %799 = vst.msk [vmem:[%s783 + $0xb1] sm:$0xff] %vm737, %v720
      %800 = vst.msk [vmem:[%s783 + $0xc1] sm:$0xff] %vm737, %v721
      %801 = vst.msk [vmem:[%s783 + $0xc9] sm:$0xff] %vm737, %v722
      %802 = vst.msk [vmem:[%s783 + $0xd9] sm:$0xff] %vm737, %v723
      %803 = vst.msk [vmem:[%s783 + $0xe1] sm:$0xff] %vm737, %v724
      %804 = vst.msk [vmem:[%s783 + $0xf1] sm:$0xff] %vm737, %v725
      %805 = vst.msk [vmem:[%s783 + $0xf9] sm:$0xff] %vm737, %v726
      %806 = vst.msk [vmem:[%s783 + $0x109] sm:$0xff] %vm737, %v727
      %807 = vst.msk [vmem:[%s783 + $0x111] sm:$0xff] %vm737, %v728
      %808 = vst.msk [vmem:[%s783 + $0x121] sm:$0xff] %vm737, %v729
      %809 = vst.msk [vmem:[%s783 + $0x129] sm:$0xff] %vm737, %v730
      %810 = vst.msk [vmem:[%s783 + $0x139] sm:$0xff] %vm737, %v731
      %811 = vst.msk [vmem:[%s783 + $0x141] sm:$0xff] %vm737, %v732
      %812 = vst.msk [vmem:[%s783 + $0x151] sm:$0xff] %vm737, %v733
      %813 = vst.msk [vmem:[%s783 + $0x159] sm:$0xff] %vm737, %v734
      %814 = vst.msk [vmem:[%s783 + $0x169] sm:$0xff] %vm737, %v735
      %815 = vst.msk [vmem:[%s783 + $0x171] sm:$0xff] %vm737, %v736
      %v816 = vld [vmem:[#allocation2] sm:$0xff]
      %v817 = vld [vmem:[#allocation2 + $0x8] sm:$0xff]
      %v818 = vld [vmem:[#allocation2 + $0x10] sm:$0x3]
      %v819 = vld [vmem:[#allocation2 + $0x18] sm:$0xff]
      %v820 = vld [vmem:[#allocation2 + $0x20] sm:$0xff]
      %v821 = vld [vmem:[#allocation2 + $0x28] sm:$0x3]
      %v822 = vld [vmem:[#allocation2 + $0x30] sm:$0xff]
      %v823 = vld [vmem:[#allocation2 + $0x38] sm:$0xff]
      %v824 = vld [vmem:[#allocation2 + $0x40] sm:$0x3]
      %v825 = vld [vmem:[#allocation2 + $0x48] sm:$0xff]
      %v826 = vld [vmem:[#allocation2 + $0x50] sm:$0xff]
      %v827 = vld [vmem:[#allocation2 + $0x58] sm:$0x3]
      %v828 = vld [vmem:[#allocation2 + $0x60] sm:$0xff]
      %v829 = vld [vmem:[#allocation2 + $0x68] sm:$0xff]
      %v830 = vld [vmem:[#allocation2 + $0x70] sm:$0x3]
      %v831 = vld [vmem:[#allocation2 + $0x78] sm:$0xff]
      %v832 = vld [vmem:[#allocation2 + $0x80] sm:$0xff]
      %v833 = vld [vmem:[#allocation2 + $0x88] sm:$0x3]
      %v834 = vld [vmem:[#allocation2 + $0x90] sm:$0xff]
      %v835 = vld [vmem:[#allocation2 + $0x98] sm:$0xff]
      %v836 = vld [vmem:[#allocation2 + $0xa0] sm:$0x3]
      %v837 = vld [vmem:[#allocation2 + $0xa8] sm:$0xff]
      %v838 = vld [vmem:[#allocation2 + $0xb0] sm:$0xff]
      %v839 = vld [vmem:[#allocation2 + $0xb8] sm:$0x3]
      %v840 = vld [vmem:[#allocation2 + $0xc0] sm:$0xff]
      %v841 = vld [vmem:[#allocation2 + $0xc8] sm:$0xff]
      %v842 = vld [vmem:[#allocation2 + $0xd0] sm:$0x3]
      %v843 = vld [vmem:[#allocation2 + $0xd8] sm:$0xff]
      %v844 = vld [vmem:[#allocation2 + $0xe0] sm:$0xff]
      %v845 = vld [vmem:[#allocation2 + $0xe8] sm:$0x3]
      %v846 = vld [vmem:[#allocation2 + $0xf0] sm:$0xff]
      %v847 = vld [vmem:[#allocation2 + $0xf8] sm:$0xff]
      %v848 = vld [vmem:[#allocation2 + $0x100] sm:$0x3]
      %v849 = vld [vmem:[#allocation2 + $0x108] sm:$0xff]
      %v850 = vld [vmem:[#allocation2 + $0x110] sm:$0xff]
      %v851 = vld [vmem:[#allocation2 + $0x118] sm:$0x3]
      %v852 = vld [vmem:[#allocation2 + $0x120] sm:$0xff]
      %v853 = vld [vmem:[#allocation2 + $0x128] sm:$0xff]
      %v854 = vld [vmem:[#allocation2 + $0x130] sm:$0x3]
      %v855 = vld [vmem:[#allocation2 + $0x138] sm:$0xff]
      %v856 = vld [vmem:[#allocation2 + $0x140] sm:$0xff]
      %v857 = vld [vmem:[#allocation2 + $0x148] sm:$0x3]
      %v858 = vld [vmem:[#allocation2 + $0x150] sm:$0xff]
      %v859 = vld [vmem:[#allocation2 + $0x158] sm:$0xff]
      %v860 = vld [vmem:[#allocation2 + $0x160] sm:$0x3]
      %v861 = vld [vmem:[#allocation2 + $0x168] sm:$0xff]
      %v862 = vld [vmem:[#allocation2 + $0x170] sm:$0xff]
      %v863 = vld [vmem:[#allocation2 + $0x178] sm:$0x3]
      %v864 = vld [vmem:[#allocation2 + $0x180] sm:$0xff]
      %v865 = vld [vmem:[#allocation2 + $0x188] sm:$0xff]
      %v866 = vld [vmem:[#allocation2 + $0x190] sm:$0x3]
      %v867 = vld [vmem:[#allocation2 + $0x198] sm:$0xff]
      %v868 = vld [vmem:[#allocation2 + $0x1a0] sm:$0xff]
      %v869 = vld [vmem:[#allocation2 + $0x1a8] sm:$0x3]
      %vm918 = vcmask 1046528
      %v919 = vrot.slane %v816, 1
      %v920 = vrot.slane %v817, 1
      %v921 = vsel %vm918, %v919, %v920
      %v922 = vrot.slane %v818, 1
      %v923 = vsel %vm918, %v920, %v922
      %v924 = vrot.slane %v819, 1
      %v925 = vrot.slane %v820, 1
      %v926 = vsel %vm918, %v924, %v925
      %v927 = vrot.slane %v821, 1
      %v928 = vsel %vm918, %v925, %v927
      %v929 = vrot.slane %v822, 1
      %v930 = vrot.slane %v823, 1
      %v931 = vsel %vm918, %v929, %v930
      %v932 = vrot.slane %v824, 1
      %v933 = vsel %vm918, %v930, %v932
      %v934 = vrot.slane %v825, 1
      %v935 = vrot.slane %v826, 1
      %v936 = vsel %vm918, %v934, %v935
      %v937 = vrot.slane %v827, 1
      %v938 = vsel %vm918, %v935, %v937
      %v939 = vrot.slane %v828, 1
      %v940 = vrot.slane %v829, 1
      %v941 = vsel %vm918, %v939, %v940
      %v942 = vrot.slane %v830, 1
      %v943 = vsel %vm918, %v940, %v942
      %v944 = vrot.slane %v831, 1
      %v945 = vrot.slane %v832, 1
      %v946 = vsel %vm918, %v944, %v945
      %v947 = vrot.slane %v833, 1
      %v948 = vsel %vm918, %v945, %v947
      %v949 = vrot.slane %v834, 1
      %v950 = vrot.slane %v835, 1
      %v951 = vsel %vm918, %v949, %v950
      %v952 = vrot.slane %v836, 1
      %v953 = vsel %vm918, %v950, %v952
      %v954 = vrot.slane %v837, 1
      %v955 = vrot.slane %v838, 1
      %v956 = vsel %vm918, %v954, %v955
      %v957 = vrot.slane %v839, 1
      %v958 = vsel %vm918, %v955, %v957
      %v959 = vrot.slane %v840, 1
      %v960 = vrot.slane %v841, 1
      %v961 = vsel %vm918, %v959, %v960
      %v962 = vrot.slane %v842, 1
      %v963 = vsel %vm918, %v960, %v962
      %v964 = vrot.slane %v843, 1
      %v965 = vrot.slane %v844, 1
      %v966 = vsel %vm918, %v964, %v965
      %v967 = vrot.slane %v845, 1
      %v968 = vsel %vm918, %v965, %v967
      %v969 = vrot.slane %v846, 1
      %v970 = vrot.slane %v847, 1
      %v971 = vsel %vm918, %v969, %v970
      %v972 = vrot.slane %v848, 1
      %v973 = vsel %vm918, %v970, %v972
      %v974 = vrot.slane %v849, 1
      %v975 = vrot.slane %v850, 1
      %v976 = vsel %vm918, %v974, %v975
      %v977 = vrot.slane %v851, 1
      %v978 = vsel %vm918, %v975, %v977
      %v979 = vrot.slane %v852, 1
      %v980 = vrot.slane %v853, 1
      %v981 = vsel %vm918, %v979, %v980
      %v982 = vrot.slane %v854, 1
      %v983 = vsel %vm918, %v980, %v982
      %v984 = vrot.slane %v855, 1
      %v985 = vrot.slane %v856, 1
      %v986 = vsel %vm918, %v984, %v985
      %v987 = vrot.slane %v857, 1
      %v988 = vsel %vm918, %v985, %v987
      %v989 = vrot.slane %v858, 1
      %v990 = vrot.slane %v859, 1
      %v991 = vsel %vm918, %v989, %v990
      %v992 = vrot.slane %v860, 1
      %v993 = vsel %vm918, %v990, %v992
      %v994 = vrot.slane %v861, 1
      %v995 = vrot.slane %v862, 1
      %v996 = vsel %vm918, %v994, %v995
      %v997 = vrot.slane %v863, 1
      %v998 = vsel %vm918, %v995, %v997
      %vm999 = vcmask 1045504
      %v1000 = vrot.slane %v816, 2
      %v1001 = vrot.slane %v817, 2
      %v1002 = vsel %vm999, %v1000, %v1001
      %v1003 = vrot.slane %v818, 2
      %v1004 = vsel %vm999, %v1001, %v1003
      %v1005 = vrot.slane %v819, 2
      %v1006 = vrot.slane %v820, 2
      %v1007 = vsel %vm999, %v1005, %v1006
      %v1008 = vrot.slane %v821, 2
      %v1009 = vsel %vm999, %v1006, %v1008
      %v1010 = vrot.slane %v822, 2
      %v1011 = vrot.slane %v823, 2
      %v1012 = vsel %vm999, %v1010, %v1011
      %v1013 = vrot.slane %v824, 2
      %v1014 = vsel %vm999, %v1011, %v1013
      %v1015 = vrot.slane %v825, 2
      %v1016 = vrot.slane %v826, 2
      %v1017 = vsel %vm999, %v1015, %v1016
      %v1018 = vrot.slane %v827, 2
      %v1019 = vsel %vm999, %v1016, %v1018
      %v1020 = vrot.slane %v828, 2
      %v1021 = vrot.slane %v829, 2
      %v1022 = vsel %vm999, %v1020, %v1021
      %v1023 = vrot.slane %v830, 2
      %v1024 = vsel %vm999, %v1021, %v1023
      %v1025 = vrot.slane %v831, 2
      %v1026 = vrot.slane %v832, 2
      %v1027 = vsel %vm999, %v1025, %v1026
      %v1028 = vrot.slane %v833, 2
      %v1029 = vsel %vm999, %v1026, %v1028
      %v1030 = vrot.slane %v834, 2
      %v1031 = vrot.slane %v835, 2
      %v1032 = vsel %vm999, %v1030, %v1031
      %v1033 = vrot.slane %v836, 2
      %v1034 = vsel %vm999, %v1031, %v1033
      %v1035 = vrot.slane %v837, 2
      %v1036 = vrot.slane %v838, 2
      %v1037 = vsel %vm999, %v1035, %v1036
      %v1038 = vrot.slane %v839, 2
      %v1039 = vsel %vm999, %v1036, %v1038
      %v1040 = vrot.slane %v840, 2
      %v1041 = vrot.slane %v841, 2
      %v1042 = vsel %vm999, %v1040, %v1041
      %v1043 = vrot.slane %v842, 2
      %v1044 = vsel %vm999, %v1041, %v1043
      %v1045 = vrot.slane %v843, 2
      %v1046 = vrot.slane %v844, 2
      %v1047 = vsel %vm999, %v1045, %v1046
      %v1048 = vrot.slane %v845, 2
      %v1049 = vsel %vm999, %v1046, %v1048
      %v1050 = vrot.slane %v846, 2
      %v1051 = vrot.slane %v847, 2
      %v1052 = vsel %vm999, %v1050, %v1051
      %v1053 = vrot.slane %v848, 2
      %v1054 = vsel %vm999, %v1051, %v1053
      %v1055 = vrot.slane %v849, 2
      %v1056 = vrot.slane %v850, 2
      %v1057 = vsel %vm999, %v1055, %v1056
      %v1058 = vrot.slane %v851, 2
      %v1059 = vsel %vm999, %v1056, %v1058
      %v1060 = vrot.slane %v852, 2
      %v1061 = vrot.slane %v853, 2
      %v1062 = vsel %vm999, %v1060, %v1061
      %v1063 = vrot.slane %v854, 2
      %v1064 = vsel %vm999, %v1061, %v1063
      %v1065 = vrot.slane %v855, 2
      %v1066 = vrot.slane %v856, 2
      %v1067 = vsel %vm999, %v1065, %v1066
      %v1068 = vrot.slane %v857, 2
      %v1069 = vsel %vm999, %v1066, %v1068
      %v1070 = vrot.slane %v858, 2
      %v1071 = vrot.slane %v859, 2
      %v1072 = vsel %vm999, %v1070, %v1071
      %v1073 = vrot.slane %v860, 2
      %v1074 = vsel %vm999, %v1071, %v1073
      %v1075 = vrot.slane %v861, 2
      %v1076 = vrot.slane %v862, 2
      %v1077 = vsel %vm999, %v1075, %v1076
      %v1078 = vrot.slane %v863, 2
      %v1079 = vsel %vm999, %v1076, %v1078
      %v1083 = vrot.slane %v864, 1
      %v1084 = vrot.slane %v865, 1
      %v1085 = vsel %vm918, %v1083, %v1084
      %v1086 = vrot.slane %v866, 1
      %v1087 = vsel %vm918, %v1084, %v1086
      %v1088 = vrot.slane %v864, 2
      %v1089 = vrot.slane %v865, 2
      %v1090 = vsel %vm999, %v1088, %v1089
      %v1091 = vrot.slane %v866, 2
      %v1092 = vsel %vm999, %v1089, %v1091
      %v1096 = vrot.slane %v867, 1
      %v1097 = vrot.slane %v868, 1
      %v1098 = vsel %vm918, %v1096, %v1097
      %v1099 = vrot.slane %v869, 1
      %v1100 = vsel %vm918, %v1097, %v1099
      %v1101 = vrot.slane %v867, 2
      %v1102 = vrot.slane %v868, 2
      %v1103 = vsel %vm999, %v1101, %v1102
      %v1104 = vrot.slane %v869, 2
      %v1105 = vsel %vm999, %v1102, %v1104
      %1106 = vrot.lane.b32.xlu0 %v921, 4
      %v1107 = vpop.permute.xlu0 %1106
      %1108 = vrot.lane.b32.xlu0 %v923, 4
      %v1109 = vpop.permute.xlu0 %1108
      %1110 = vrot.lane.b32.xlu0 %v926, 4
      %v1111 = vpop.permute.xlu0 %1110
      %1112 = vrot.lane.b32.xlu0 %v928, 4
      %v1113 = vpop.permute.xlu0 %1112
      %1114 = vrot.lane.b32.xlu0 %v931, 4
      %v1115 = vpop.permute.xlu0 %1114
      %1116 = vrot.lane.b32.xlu0 %v933, 4
      %v1117 = vpop.permute.xlu0 %1116
      %1118 = vrot.lane.b32.xlu0 %v936, 4
      %v1119 = vpop.permute.xlu0 %1118
      %1120 = vrot.lane.b32.xlu0 %v938, 4
      %v1121 = vpop.permute.xlu0 %1120
      %1122 = vrot.lane.b32.xlu0 %v941, 4
      %v1123 = vpop.permute.xlu0 %1122
      %1124 = vrot.lane.b32.xlu0 %v943, 4
      %v1125 = vpop.permute.xlu0 %1124
      %1126 = vrot.lane.b32.xlu0 %v946, 4
      %v1127 = vpop.permute.xlu0 %1126
      %1128 = vrot.lane.b32.xlu0 %v948, 4
      %v1129 = vpop.permute.xlu0 %1128
      %1130 = vrot.lane.b32.xlu0 %v951, 4
      %v1131 = vpop.permute.xlu0 %1130
      %1132 = vrot.lane.b32.xlu0 %v953, 4
      %v1133 = vpop.permute.xlu0 %1132
      %1134 = vrot.lane.b32.xlu0 %v956, 4
      %v1135 = vpop.permute.xlu0 %1134
      %1136 = vrot.lane.b32.xlu0 %v958, 4
      %v1137 = vpop.permute.xlu0 %1136
      %1138 = vrot.lane.b32.xlu0 %v961, 4
      %v1139 = vpop.permute.xlu0 %1138
      %1140 = vrot.lane.b32.xlu0 %v963, 4
      %v1141 = vpop.permute.xlu0 %1140
      %1142 = vrot.lane.b32.xlu0 %v966, 4
      %v1143 = vpop.permute.xlu0 %1142
      %1144 = vrot.lane.b32.xlu0 %v968, 4
      %v1145 = vpop.permute.xlu0 %1144
      %1146 = vrot.lane.b32.xlu0 %v971, 4
      %v1147 = vpop.permute.xlu0 %1146
      %1148 = vrot.lane.b32.xlu0 %v973, 4
      %v1149 = vpop.permute.xlu0 %1148
      %1150 = vrot.lane.b32.xlu0 %v976, 4
      %v1151 = vpop.permute.xlu0 %1150
      %1152 = vrot.lane.b32.xlu0 %v978, 4
      %v1153 = vpop.permute.xlu0 %1152
      %1154 = vrot.lane.b32.xlu0 %v981, 4
      %v1155 = vpop.permute.xlu0 %1154
      %1156 = vrot.lane.b32.xlu0 %v983, 4
      %v1157 = vpop.permute.xlu0 %1156
      %1158 = vrot.lane.b32.xlu0 %v986, 4
      %v1159 = vpop.permute.xlu0 %1158
      %1160 = vrot.lane.b32.xlu0 %v988, 4
      %v1161 = vpop.permute.xlu0 %1160
      %1162 = vrot.lane.b32.xlu0 %v991, 4
      %v1163 = vpop.permute.xlu0 %1162
      %1164 = vrot.lane.b32.xlu0 %v993, 4
      %v1165 = vpop.permute.xlu0 %1164
      %1166 = vrot.lane.b32.xlu0 %v996, 4
      %v1167 = vpop.permute.xlu0 %1166
      %1168 = vrot.lane.b32.xlu0 %v998, 4
      %v1169 = vpop.permute.xlu0 %1168
      %1202 = vrot.lane.b32.xlu0 %v1002, 8
      %v1203 = vpop.permute.xlu0 %1202
      %1204 = vrot.lane.b32.xlu0 %v1004, 8
      %v1205 = vpop.permute.xlu0 %1204
      %1206 = vrot.lane.b32.xlu0 %v1007, 8
      %v1207 = vpop.permute.xlu0 %1206
      %1208 = vrot.lane.b32.xlu0 %v1009, 8
      %v1209 = vpop.permute.xlu0 %1208
      %1210 = vrot.lane.b32.xlu0 %v1012, 8
      %v1211 = vpop.permute.xlu0 %1210
      %1212 = vrot.lane.b32.xlu0 %v1014, 8
      %v1213 = vpop.permute.xlu0 %1212
      %1214 = vrot.lane.b32.xlu0 %v1017, 8
      %v1215 = vpop.permute.xlu0 %1214
      %1216 = vrot.lane.b32.xlu0 %v1019, 8
      %v1217 = vpop.permute.xlu0 %1216
      %1218 = vrot.lane.b32.xlu0 %v1022, 8
      %v1219 = vpop.permute.xlu0 %1218
      %1220 = vrot.lane.b32.xlu0 %v1024, 8
      %v1221 = vpop.permute.xlu0 %1220
      %1222 = vrot.lane.b32.xlu0 %v1027, 8
      %v1223 = vpop.permute.xlu0 %1222
      %1224 = vrot.lane.b32.xlu0 %v1029, 8
      %v1225 = vpop.permute.xlu0 %1224
      %1226 = vrot.lane.b32.xlu0 %v1032, 8
      %v1227 = vpop.permute.xlu0 %1226
      %1228 = vrot.lane.b32.xlu0 %v1034, 8
      %v1229 = vpop.permute.xlu0 %1228
      %1230 = vrot.lane.b32.xlu0 %v1037, 8
      %v1231 = vpop.permute.xlu0 %1230
      %1232 = vrot.lane.b32.xlu0 %v1039, 8
      %v1233 = vpop.permute.xlu0 %1232
      %1234 = vrot.lane.b32.xlu0 %v1042, 8
      %v1235 = vpop.permute.xlu0 %1234
      %1236 = vrot.lane.b32.xlu0 %v1044, 8
      %v1237 = vpop.permute.xlu0 %1236
      %1238 = vrot.lane.b32.xlu0 %v1047, 8
      %v1239 = vpop.permute.xlu0 %1238
      %1240 = vrot.lane.b32.xlu0 %v1049, 8
      %v1241 = vpop.permute.xlu0 %1240
      %1242 = vrot.lane.b32.xlu0 %v1052, 8
      %v1243 = vpop.permute.xlu0 %1242
      %1244 = vrot.lane.b32.xlu0 %v1054, 8
      %v1245 = vpop.permute.xlu0 %1244
      %1246 = vrot.lane.b32.xlu0 %v1057, 8
      %v1247 = vpop.permute.xlu0 %1246
      %1248 = vrot.lane.b32.xlu0 %v1059, 8
      %v1249 = vpop.permute.xlu0 %1248
      %1250 = vrot.lane.b32.xlu0 %v1062, 8
      %v1251 = vpop.permute.xlu0 %1250
      %1252 = vrot.lane.b32.xlu0 %v1064, 8
      %v1253 = vpop.permute.xlu0 %1252
      %1254 = vrot.lane.b32.xlu0 %v1067, 8
      %v1255 = vpop.permute.xlu0 %1254
      %1256 = vrot.lane.b32.xlu0 %v1069, 8
      %v1257 = vpop.permute.xlu0 %1256
      %1258 = vrot.lane.b32.xlu0 %v1072, 8
      %v1259 = vpop.permute.xlu0 %1258
      %1260 = vrot.lane.b32.xlu0 %v1074, 8
      %v1261 = vpop.permute.xlu0 %1260
      %1262 = vrot.lane.b32.xlu0 %v1077, 8
      %v1263 = vpop.permute.xlu0 %1262
      %1264 = vrot.lane.b32.xlu0 %v1079, 8
      %v1265 = vpop.permute.xlu0 %1264
      %1298 = vrot.lane.b32.xlu0 %v819, 12
      %v1299 = vpop.permute.xlu0 %1298
      %1300 = vrot.lane.b32.xlu0 %v820, 12
      %v1301 = vpop.permute.xlu0 %1300
      %1302 = vrot.lane.b32.xlu0 %v822, 12
      %v1303 = vpop.permute.xlu0 %1302
      %1304 = vrot.lane.b32.xlu0 %v823, 12
      %v1305 = vpop.permute.xlu0 %1304
      %1306 = vrot.lane.b32.xlu0 %v825, 12
      %v1307 = vpop.permute.xlu0 %1306
      %1308 = vrot.lane.b32.xlu0 %v826, 12
      %v1309 = vpop.permute.xlu0 %1308
      %1310 = vrot.lane.b32.xlu0 %v828, 12
      %v1311 = vpop.permute.xlu0 %1310
      %1312 = vrot.lane.b32.xlu0 %v829, 12
      %v1313 = vpop.permute.xlu0 %1312
      %1314 = vrot.lane.b32.xlu0 %v831, 12
      %v1315 = vpop.permute.xlu0 %1314
      %1316 = vrot.lane.b32.xlu0 %v832, 12
      %v1317 = vpop.permute.xlu0 %1316
      %1318 = vrot.lane.b32.xlu0 %v834, 12
      %v1319 = vpop.permute.xlu0 %1318
      %1320 = vrot.lane.b32.xlu0 %v835, 12
      %v1321 = vpop.permute.xlu0 %1320
      %1322 = vrot.lane.b32.xlu0 %v837, 12
      %v1323 = vpop.permute.xlu0 %1322
      %1324 = vrot.lane.b32.xlu0 %v838, 12
      %v1325 = vpop.permute.xlu0 %1324
      %1326 = vrot.lane.b32.xlu0 %v840, 12
      %v1327 = vpop.permute.xlu0 %1326
      %1328 = vrot.lane.b32.xlu0 %v841, 12
      %v1329 = vpop.permute.xlu0 %1328
      %1330 = vrot.lane.b32.xlu0 %v843, 12
      %v1331 = vpop.permute.xlu0 %1330
      %1332 = vrot.lane.b32.xlu0 %v844, 12
      %v1333 = vpop.permute.xlu0 %1332
      %1334 = vrot.lane.b32.xlu0 %v846, 12
      %v1335 = vpop.permute.xlu0 %1334
      %1336 = vrot.lane.b32.xlu0 %v847, 12
      %v1337 = vpop.permute.xlu0 %1336
      %1338 = vrot.lane.b32.xlu0 %v849, 12
      %v1339 = vpop.permute.xlu0 %1338
      %1340 = vrot.lane.b32.xlu0 %v850, 12
      %v1341 = vpop.permute.xlu0 %1340
      %1342 = vrot.lane.b32.xlu0 %v852, 12
      %v1343 = vpop.permute.xlu0 %1342
      %1344 = vrot.lane.b32.xlu0 %v853, 12
      %v1345 = vpop.permute.xlu0 %1344
      %1346 = vrot.lane.b32.xlu0 %v855, 12
      %v1347 = vpop.permute.xlu0 %1346
      %1348 = vrot.lane.b32.xlu0 %v856, 12
      %v1349 = vpop.permute.xlu0 %1348
      %1350 = vrot.lane.b32.xlu0 %v858, 12
      %v1351 = vpop.permute.xlu0 %1350
      %1352 = vrot.lane.b32.xlu0 %v859, 12
      %v1353 = vpop.permute.xlu0 %1352
      %1354 = vrot.lane.b32.xlu0 %v861, 12
      %v1355 = vpop.permute.xlu0 %1354
      %1356 = vrot.lane.b32.xlu0 %v862, 12
      %v1357 = vpop.permute.xlu0 %1356
      %1358 = vrot.lane.b32.xlu0 %v864, 12
      %v1359 = vpop.permute.xlu0 %1358
      %1360 = vrot.lane.b32.xlu0 %v865, 12
      %v1361 = vpop.permute.xlu0 %1360
      %1394 = vrot.lane.b32.xlu0 %v926, 16
      %v1395 = vpop.permute.xlu0 %1394
      %1396 = vrot.lane.b32.xlu0 %v928, 16
      %v1397 = vpop.permute.xlu0 %1396
      %1398 = vrot.lane.b32.xlu0 %v931, 16
      %v1399 = vpop.permute.xlu0 %1398
      %1400 = vrot.lane.b32.xlu0 %v933, 16
      %v1401 = vpop.permute.xlu0 %1400
      %1402 = vrot.lane.b32.xlu0 %v936, 16
      %v1403 = vpop.permute.xlu0 %1402
      %1404 = vrot.lane.b32.xlu0 %v938, 16
      %v1405 = vpop.permute.xlu0 %1404
      %1406 = vrot.lane.b32.xlu0 %v941, 16
      %v1407 = vpop.permute.xlu0 %1406
      %1408 = vrot.lane.b32.xlu0 %v943, 16
      %v1409 = vpop.permute.xlu0 %1408
      %1410 = vrot.lane.b32.xlu0 %v946, 16
      %v1411 = vpop.permute.xlu0 %1410
      %1412 = vrot.lane.b32.xlu0 %v948, 16
      %v1413 = vpop.permute.xlu0 %1412
      %1414 = vrot.lane.b32.xlu0 %v951, 16
      %v1415 = vpop.permute.xlu0 %1414
      %1416 = vrot.lane.b32.xlu0 %v953, 16
      %v1417 = vpop.permute.xlu0 %1416
      %1418 = vrot.lane.b32.xlu0 %v956, 16
      %v1419 = vpop.permute.xlu0 %1418
      %1420 = vrot.lane.b32.xlu0 %v958, 16
      %v1421 = vpop.permute.xlu0 %1420
      %1422 = vrot.lane.b32.xlu0 %v961, 16
      %v1423 = vpop.permute.xlu0 %1422
      %1424 = vrot.lane.b32.xlu0 %v963, 16
      %v1425 = vpop.permute.xlu0 %1424
      %1426 = vrot.lane.b32.xlu0 %v966, 16
      %v1427 = vpop.permute.xlu0 %1426
      %1428 = vrot.lane.b32.xlu0 %v968, 16
      %v1429 = vpop.permute.xlu0 %1428
      %1430 = vrot.lane.b32.xlu0 %v971, 16
      %v1431 = vpop.permute.xlu0 %1430
      %1432 = vrot.lane.b32.xlu0 %v973, 16
      %v1433 = vpop.permute.xlu0 %1432
      %1434 = vrot.lane.b32.xlu0 %v976, 16
      %v1435 = vpop.permute.xlu0 %1434
      %1436 = vrot.lane.b32.xlu0 %v978, 16
      %v1437 = vpop.permute.xlu0 %1436
      %1438 = vrot.lane.b32.xlu0 %v981, 16
      %v1439 = vpop.permute.xlu0 %1438
      %1440 = vrot.lane.b32.xlu0 %v983, 16
      %v1441 = vpop.permute.xlu0 %1440
      %1442 = vrot.lane.b32.xlu0 %v986, 16
      %v1443 = vpop.permute.xlu0 %1442
      %1444 = vrot.lane.b32.xlu0 %v988, 16
      %v1445 = vpop.permute.xlu0 %1444
      %1446 = vrot.lane.b32.xlu0 %v991, 16
      %v1447 = vpop.permute.xlu0 %1446
      %1448 = vrot.lane.b32.xlu0 %v993, 16
      %v1449 = vpop.permute.xlu0 %1448
      %1450 = vrot.lane.b32.xlu0 %v996, 16
      %v1451 = vpop.permute.xlu0 %1450
      %1452 = vrot.lane.b32.xlu0 %v998, 16
      %v1453 = vpop.permute.xlu0 %1452
      %1454 = vrot.lane.b32.xlu0 %v1085, 16
      %v1455 = vpop.permute.xlu0 %1454
      %1456 = vrot.lane.b32.xlu0 %v1087, 16
      %v1457 = vpop.permute.xlu0 %1456
      %1490 = vrot.lane.b32.xlu0 %v1007, 20
      %v1491 = vpop.permute.xlu0 %1490
      %1492 = vrot.lane.b32.xlu0 %v1009, 20
      %v1493 = vpop.permute.xlu0 %1492
      %1494 = vrot.lane.b32.xlu0 %v1012, 20
      %v1495 = vpop.permute.xlu0 %1494
      %1496 = vrot.lane.b32.xlu0 %v1014, 20
      %v1497 = vpop.permute.xlu0 %1496
      %1498 = vrot.lane.b32.xlu0 %v1017, 20
      %v1499 = vpop.permute.xlu0 %1498
      %1500 = vrot.lane.b32.xlu0 %v1019, 20
      %v1501 = vpop.permute.xlu0 %1500
      %1502 = vrot.lane.b32.xlu0 %v1022, 20
      %v1503 = vpop.permute.xlu0 %1502
      %1504 = vrot.lane.b32.xlu0 %v1024, 20
      %v1505 = vpop.permute.xlu0 %1504
      %1506 = vrot.lane.b32.xlu0 %v1027, 20
      %v1507 = vpop.permute.xlu0 %1506
      %1508 = vrot.lane.b32.xlu0 %v1029, 20
      %v1509 = vpop.permute.xlu0 %1508
      %1510 = vrot.lane.b32.xlu0 %v1032, 20
      %v1511 = vpop.permute.xlu0 %1510
      %1512 = vrot.lane.b32.xlu0 %v1034, 20
      %v1513 = vpop.permute.xlu0 %1512
      %1514 = vrot.lane.b32.xlu0 %v1037, 20
      %v1515 = vpop.permute.xlu0 %1514
      %1516 = vrot.lane.b32.xlu0 %v1039, 20
      %v1517 = vpop.permute.xlu0 %1516
      %1518 = vrot.lane.b32.xlu0 %v1042, 20
      %v1519 = vpop.permute.xlu0 %1518
      %1520 = vrot.lane.b32.xlu0 %v1044, 20
      %v1521 = vpop.permute.xlu0 %1520
      %1522 = vrot.lane.b32.xlu0 %v1047, 20
      %v1523 = vpop.permute.xlu0 %1522
      %1524 = vrot.lane.b32.xlu0 %v1049, 20
      %v1525 = vpop.permute.xlu0 %1524
      %1526 = vrot.lane.b32.xlu0 %v1052, 20
      %v1527 = vpop.permute.xlu0 %1526
      %1528 = vrot.lane.b32.xlu0 %v1054, 20
      %v1529 = vpop.permute.xlu0 %1528
      %1530 = vrot.lane.b32.xlu0 %v1057, 20
      %v1531 = vpop.permute.xlu0 %1530
      %1532 = vrot.lane.b32.xlu0 %v1059, 20
      %v1533 = vpop.permute.xlu0 %1532
      %1534 = vrot.lane.b32.xlu0 %v1062, 20
      %v1535 = vpop.permute.xlu0 %1534
      %1536 = vrot.lane.b32.xlu0 %v1064, 20
      %v1537 = vpop.permute.xlu0 %1536
      %1538 = vrot.lane.b32.xlu0 %v1067, 20
      %v1539 = vpop.permute.xlu0 %1538
      %1540 = vrot.lane.b32.xlu0 %v1069, 20
      %v1541 = vpop.permute.xlu0 %1540
      %1542 = vrot.lane.b32.xlu0 %v1072, 20
      %v1543 = vpop.permute.xlu0 %1542
      %1544 = vrot.lane.b32.xlu0 %v1074, 20
      %v1545 = vpop.permute.xlu0 %1544
      %1546 = vrot.lane.b32.xlu0 %v1077, 20
      %v1547 = vpop.permute.xlu0 %1546
      %1548 = vrot.lane.b32.xlu0 %v1079, 20
      %v1549 = vpop.permute.xlu0 %1548
      %1550 = vrot.lane.b32.xlu0 %v1090, 20
      %v1551 = vpop.permute.xlu0 %1550
      %1552 = vrot.lane.b32.xlu0 %v1092, 20
      %v1553 = vpop.permute.xlu0 %1552
      %1586 = vrot.lane.b32.xlu0 %v822, 24
      %v1587 = vpop.permute.xlu0 %1586
      %1588 = vrot.lane.b32.xlu0 %v823, 24
      %v1589 = vpop.permute.xlu0 %1588
      %1590 = vrot.lane.b32.xlu0 %v825, 24
      %v1591 = vpop.permute.xlu0 %1590
      %1592 = vrot.lane.b32.xlu0 %v826, 24
      %v1593 = vpop.permute.xlu0 %1592
      %1594 = vrot.lane.b32.xlu0 %v828, 24
      %v1595 = vpop.permute.xlu0 %1594
      %1596 = vrot.lane.b32.xlu0 %v829, 24
      %v1597 = vpop.permute.xlu0 %1596
      %1598 = vrot.lane.b32.xlu0 %v831, 24
      %v1599 = vpop.permute.xlu0 %1598
      %1600 = vrot.lane.b32.xlu0 %v832, 24
      %v1601 = vpop.permute.xlu0 %1600
      %1602 = vrot.lane.b32.xlu0 %v834, 24
      %v1603 = vpop.permute.xlu0 %1602
      %1604 = vrot.lane.b32.xlu0 %v835, 24
      %v1605 = vpop.permute.xlu0 %1604
      %1606 = vrot.lane.b32.xlu0 %v837, 24
      %v1607 = vpop.permute.xlu0 %1606
      %1608 = vrot.lane.b32.xlu0 %v838, 24
      %v1609 = vpop.permute.xlu0 %1608
      %1610 = vrot.lane.b32.xlu0 %v840, 24
      %v1611 = vpop.permute.xlu0 %1610
      %1612 = vrot.lane.b32.xlu0 %v841, 24
      %v1613 = vpop.permute.xlu0 %1612
      %1614 = vrot.lane.b32.xlu0 %v843, 24
      %v1615 = vpop.permute.xlu0 %1614
      %1616 = vrot.lane.b32.xlu0 %v844, 24
      %v1617 = vpop.permute.xlu0 %1616
      %1618 = vrot.lane.b32.xlu0 %v846, 24
      %v1619 = vpop.permute.xlu0 %1618
      %1620 = vrot.lane.b32.xlu0 %v847, 24
      %v1621 = vpop.permute.xlu0 %1620
      %1622 = vrot.lane.b32.xlu0 %v849, 24
      %v1623 = vpop.permute.xlu0 %1622
      %1624 = vrot.lane.b32.xlu0 %v850, 24
      %v1625 = vpop.permute.xlu0 %1624
      %1626 = vrot.lane.b32.xlu0 %v852, 24
      %v1627 = vpop.permute.xlu0 %1626
      %1628 = vrot.lane.b32.xlu0 %v853, 24
      %v1629 = vpop.permute.xlu0 %1628
      %1630 = vrot.lane.b32.xlu0 %v855, 24
      %v1631 = vpop.permute.xlu0 %1630
      %1632 = vrot.lane.b32.xlu0 %v856, 24
      %v1633 = vpop.permute.xlu0 %1632
      %1634 = vrot.lane.b32.xlu0 %v858, 24
      %v1635 = vpop.permute.xlu0 %1634
      %1636 = vrot.lane.b32.xlu0 %v859, 24
      %v1637 = vpop.permute.xlu0 %1636
      %1638 = vrot.lane.b32.xlu0 %v861, 24
      %v1639 = vpop.permute.xlu0 %1638
      %1640 = vrot.lane.b32.xlu0 %v862, 24
      %v1641 = vpop.permute.xlu0 %1640
      %1642 = vrot.lane.b32.xlu0 %v864, 24
      %v1643 = vpop.permute.xlu0 %1642
      %1644 = vrot.lane.b32.xlu0 %v865, 24
      %v1645 = vpop.permute.xlu0 %1644
      %1646 = vrot.lane.b32.xlu0 %v867, 24
      %v1647 = vpop.permute.xlu0 %1646
      %1648 = vrot.lane.b32.xlu0 %v868, 24
      %v1649 = vpop.permute.xlu0 %1648
      %1682 = vrot.lane.b32.xlu0 %v931, 28
      %v1683 = vpop.permute.xlu0 %1682
      %1684 = vrot.lane.b32.xlu0 %v933, 28
      %v1685 = vpop.permute.xlu0 %1684
      %1686 = vrot.lane.b32.xlu0 %v936, 28
      %v1687 = vpop.permute.xlu0 %1686
      %1688 = vrot.lane.b32.xlu0 %v938, 28
      %v1689 = vpop.permute.xlu0 %1688
      %1690 = vrot.lane.b32.xlu0 %v941, 28
      %v1691 = vpop.permute.xlu0 %1690
      %1692 = vrot.lane.b32.xlu0 %v943, 28
      %v1693 = vpop.permute.xlu0 %1692
      %1694 = vrot.lane.b32.xlu0 %v946, 28
      %v1695 = vpop.permute.xlu0 %1694
      %1696 = vrot.lane.b32.xlu0 %v948, 28
      %v1697 = vpop.permute.xlu0 %1696
      %1698 = vrot.lane.b32.xlu0 %v951, 28
      %v1699 = vpop.permute.xlu0 %1698
      %1700 = vrot.lane.b32.xlu0 %v953, 28
      %v1701 = vpop.permute.xlu0 %1700
      %1702 = vrot.lane.b32.xlu0 %v956, 28
      %v1703 = vpop.permute.xlu0 %1702
      %1704 = vrot.lane.b32.xlu0 %v958, 28
      %v1705 = vpop.permute.xlu0 %1704
      %1706 = vrot.lane.b32.xlu0 %v961, 28
      %v1707 = vpop.permute.xlu0 %1706
      %1708 = vrot.lane.b32.xlu0 %v963, 28
      %v1709 = vpop.permute.xlu0 %1708
      %1710 = vrot.lane.b32.xlu0 %v966, 28
      %v1711 = vpop.permute.xlu0 %1710
      %1712 = vrot.lane.b32.xlu0 %v968, 28
      %v1713 = vpop.permute.xlu0 %1712
      %1714 = vrot.lane.b32.xlu0 %v971, 28
      %v1715 = vpop.permute.xlu0 %1714
      %1716 = vrot.lane.b32.xlu0 %v973, 28
      %v1717 = vpop.permute.xlu0 %1716
      %1718 = vrot.lane.b32.xlu0 %v976, 28
      %v1719 = vpop.permute.xlu0 %1718
      %1720 = vrot.lane.b32.xlu0 %v978, 28
      %v1721 = vpop.permute.xlu0 %1720
      %1722 = vrot.lane.b32.xlu0 %v981, 28
      %v1723 = vpop.permute.xlu0 %1722
      %1724 = vrot.lane.b32.xlu0 %v983, 28
      %v1725 = vpop.permute.xlu0 %1724
      %1726 = vrot.lane.b32.xlu0 %v986, 28
      %v1727 = vpop.permute.xlu0 %1726
      %1728 = vrot.lane.b32.xlu0 %v988, 28
      %v1729 = vpop.permute.xlu0 %1728
      %1730 = vrot.lane.b32.xlu0 %v991, 28
      %v1731 = vpop.permute.xlu0 %1730
      %1732 = vrot.lane.b32.xlu0 %v993, 28
      %v1733 = vpop.permute.xlu0 %1732
      %1734 = vrot.lane.b32.xlu0 %v996, 28
      %v1735 = vpop.permute.xlu0 %1734
      %1736 = vrot.lane.b32.xlu0 %v998, 28
      %v1737 = vpop.permute.xlu0 %1736
      %1738 = vrot.lane.b32.xlu0 %v1085, 28
      %v1739 = vpop.permute.xlu0 %1738
      %1740 = vrot.lane.b32.xlu0 %v1087, 28
      %v1741 = vpop.permute.xlu0 %1740
      %1742 = vrot.lane.b32.xlu0 %v1098, 28
      %v1743 = vpop.permute.xlu0 %1742
      %1744 = vrot.lane.b32.xlu0 %v1100, 28
      %v1745 = vpop.permute.xlu0 %1744
      %1778 = vrot.lane.b32.xlu0 %v1012, 32
      %v1779 = vpop.permute.xlu0 %1778
      %1780 = vrot.lane.b32.xlu0 %v1014, 32
      %v1781 = vpop.permute.xlu0 %1780
      %1782 = vrot.lane.b32.xlu0 %v1017, 32
      %v1783 = vpop.permute.xlu0 %1782
      %1784 = vrot.lane.b32.xlu0 %v1019, 32
      %v1785 = vpop.permute.xlu0 %1784
      %1786 = vrot.lane.b32.xlu0 %v1022, 32
      %v1787 = vpop.permute.xlu0 %1786
      %1788 = vrot.lane.b32.xlu0 %v1024, 32
      %v1789 = vpop.permute.xlu0 %1788
      %1790 = vrot.lane.b32.xlu0 %v1027, 32
      %v1791 = vpop.permute.xlu0 %1790
      %1792 = vrot.lane.b32.xlu0 %v1029, 32
      %v1793 = vpop.permute.xlu0 %1792
      %1794 = vrot.lane.b32.xlu0 %v1032, 32
      %v1795 = vpop.permute.xlu0 %1794
      %1796 = vrot.lane.b32.xlu0 %v1034, 32
      %v1797 = vpop.permute.xlu0 %1796
      %1798 = vrot.lane.b32.xlu0 %v1037, 32
      %v1799 = vpop.permute.xlu0 %1798
      %1800 = vrot.lane.b32.xlu0 %v1039, 32
      %v1801 = vpop.permute.xlu0 %1800
      %1802 = vrot.lane.b32.xlu0 %v1042, 32
      %v1803 = vpop.permute.xlu0 %1802
      %1804 = vrot.lane.b32.xlu0 %v1044, 32
      %v1805 = vpop.permute.xlu0 %1804
      %1806 = vrot.lane.b32.xlu0 %v1047, 32
      %v1807 = vpop.permute.xlu0 %1806
      %1808 = vrot.lane.b32.xlu0 %v1049, 32
      %v1809 = vpop.permute.xlu0 %1808
      %1810 = vrot.lane.b32.xlu0 %v1052, 32
      %v1811 = vpop.permute.xlu0 %1810
      %1812 = vrot.lane.b32.xlu0 %v1054, 32
      %v1813 = vpop.permute.xlu0 %1812
      %1814 = vrot.lane.b32.xlu0 %v1057, 32
      %v1815 = vpop.permute.xlu0 %1814
      %1816 = vrot.lane.b32.xlu0 %v1059, 32
      %v1817 = vpop.permute.xlu0 %1816
      %1818 = vrot.lane.b32.xlu0 %v1062, 32
      %v1819 = vpop.permute.xlu0 %1818
      %1820 = vrot.lane.b32.xlu0 %v1064, 32
      %v1821 = vpop.permute.xlu0 %1820
      %1822 = vrot.lane.b32.xlu0 %v1067, 32
      %v1823 = vpop.permute.xlu0 %1822
      %1824 = vrot.lane.b32.xlu0 %v1069, 32
      %v1825 = vpop.permute.xlu0 %1824
      %1826 = vrot.lane.b32.xlu0 %v1072, 32
      %v1827 = vpop.permute.xlu0 %1826
      %1828 = vrot.lane.b32.xlu0 %v1074, 32
      %v1829 = vpop.permute.xlu0 %1828
      %1830 = vrot.lane.b32.xlu0 %v1077, 32
      %v1831 = vpop.permute.xlu0 %1830
      %1832 = vrot.lane.b32.xlu0 %v1079, 32
      %v1833 = vpop.permute.xlu0 %1832
      %1834 = vrot.lane.b32.xlu0 %v1090, 32
      %v1835 = vpop.permute.xlu0 %1834
      %1836 = vrot.lane.b32.xlu0 %v1092, 32
      %v1837 = vpop.permute.xlu0 %1836
      %1838 = vrot.lane.b32.xlu0 %v1103, 32
      %v1839 = vpop.permute.xlu0 %1838
      %1840 = vrot.lane.b32.xlu0 %v1105, 32
      %v1841 = vpop.permute.xlu0 %1840
      %v1874 = vsel %vm737, %v816, %v1107
      %v1875 = vsel %vm737, %v817, %v1109
      %v1876 = vsel %vm737, %v819, %v1111
      %v1877 = vsel %vm737, %v820, %v1113
      %v1878 = vsel %vm737, %v822, %v1115
      %v1879 = vsel %vm737, %v823, %v1117
      %v1880 = vsel %vm737, %v825, %v1119
      %v1881 = vsel %vm737, %v826, %v1121
      %v1882 = vsel %vm737, %v828, %v1123
      %v1883 = vsel %vm737, %v829, %v1125
      %v1884 = vsel %vm737, %v831, %v1127
      %v1885 = vsel %vm737, %v832, %v1129
      %v1886 = vsel %vm737, %v834, %v1131
      %v1887 = vsel %vm737, %v835, %v1133
      %v1888 = vsel %vm737, %v837, %v1135
      %v1889 = vsel %vm737, %v838, %v1137
      %v1890 = vsel %vm737, %v840, %v1139
      %v1891 = vsel %vm737, %v841, %v1141
      %v1892 = vsel %vm737, %v843, %v1143
      %v1893 = vsel %vm737, %v844, %v1145
      %v1894 = vsel %vm737, %v846, %v1147
      %v1895 = vsel %vm737, %v847, %v1149
      %v1896 = vsel %vm737, %v849, %v1151
      %v1897 = vsel %vm737, %v850, %v1153
      %v1898 = vsel %vm737, %v852, %v1155
      %v1899 = vsel %vm737, %v853, %v1157
      %v1900 = vsel %vm737, %v855, %v1159
      %v1901 = vsel %vm737, %v856, %v1161
      %v1902 = vsel %vm737, %v858, %v1163
      %v1903 = vsel %vm737, %v859, %v1165
      %v1904 = vsel %vm737, %v861, %v1167
      %v1905 = vsel %vm737, %v862, %v1169
      %vm1906 = vcmask 64512
      %v1907 = vsel %vm1906, %v1874, %v1203
      %v1908 = vsel %vm1906, %v1875, %v1205
      %v1909 = vsel %vm1906, %v1876, %v1207
      %v1910 = vsel %vm1906, %v1877, %v1209
      %v1911 = vsel %vm1906, %v1878, %v1211
      %v1912 = vsel %vm1906, %v1879, %v1213
      %v1913 = vsel %vm1906, %v1880, %v1215
      %v1914 = vsel %vm1906, %v1881, %v1217
      %v1915 = vsel %vm1906, %v1882, %v1219
      %v1916 = vsel %vm1906, %v1883, %v1221
      %v1917 = vsel %vm1906, %v1884, %v1223
      %v1918 = vsel %vm1906, %v1885, %v1225
      %v1919 = vsel %vm1906, %v1886, %v1227
      %v1920 = vsel %vm1906, %v1887, %v1229
      %v1921 = vsel %vm1906, %v1888, %v1231
      %v1922 = vsel %vm1906, %v1889, %v1233
      %v1923 = vsel %vm1906, %v1890, %v1235
      %v1924 = vsel %vm1906, %v1891, %v1237
      %v1925 = vsel %vm1906, %v1892, %v1239
      %v1926 = vsel %vm1906, %v1893, %v1241
      %v1927 = vsel %vm1906, %v1894, %v1243
      %v1928 = vsel %vm1906, %v1895, %v1245
      %v1929 = vsel %vm1906, %v1896, %v1247
      %v1930 = vsel %vm1906, %v1897, %v1249
      %v1931 = vsel %vm1906, %v1898, %v1251
      %v1932 = vsel %vm1906, %v1899, %v1253
      %v1933 = vsel %vm1906, %v1900, %v1255
      %v1934 = vsel %vm1906, %v1901, %v1257
      %v1935 = vsel %vm1906, %v1902, %v1259
      %v1936 = vsel %vm1906, %v1903, %v1261
      %v1937 = vsel %vm1906, %v1904, %v1263
      %v1938 = vsel %vm1906, %v1905, %v1265
      %vm1939 = vcmask 97280
      %v1940 = vsel %vm1939, %v1907, %v1299
      %v1941 = vsel %vm1939, %v1908, %v1301
      %v1942 = vsel %vm1939, %v1909, %v1303
      %v1943 = vsel %vm1939, %v1910, %v1305
      %v1944 = vsel %vm1939, %v1911, %v1307
      %v1945 = vsel %vm1939, %v1912, %v1309
      %v1946 = vsel %vm1939, %v1913, %v1311
      %v1947 = vsel %vm1939, %v1914, %v1313
      %v1948 = vsel %vm1939, %v1915, %v1315
      %v1949 = vsel %vm1939, %v1916, %v1317
      %v1950 = vsel %vm1939, %v1917, %v1319
      %v1951 = vsel %vm1939, %v1918, %v1321
      %v1952 = vsel %vm1939, %v1919, %v1323
      %v1953 = vsel %vm1939, %v1920, %v1325
      %v1954 = vsel %vm1939, %v1921, %v1327
      %v1955 = vsel %vm1939, %v1922, %v1329
      %v1956 = vsel %vm1939, %v1923, %v1331
      %v1957 = vsel %vm1939, %v1924, %v1333
      %v1958 = vsel %vm1939, %v1925, %v1335
      %v1959 = vsel %vm1939, %v1926, %v1337
      %v1960 = vsel %vm1939, %v1927, %v1339
      %v1961 = vsel %vm1939, %v1928, %v1341
      %v1962 = vsel %vm1939, %v1929, %v1343
      %v1963 = vsel %vm1939, %v1930, %v1345
      %v1964 = vsel %vm1939, %v1931, %v1347
      %v1965 = vsel %vm1939, %v1932, %v1349
      %v1966 = vsel %vm1939, %v1933, %v1351
      %v1967 = vsel %vm1939, %v1934, %v1353
      %v1968 = vsel %vm1939, %v1935, %v1355
      %v1969 = vsel %vm1939, %v1936, %v1357
      %v1970 = vsel %vm1939, %v1937, %v1359
      %v1971 = vsel %vm1939, %v1938, %v1361
      %v1972 = vsel %vm417, %v1940, %v1395
      %v1973 = vsel %vm417, %v1941, %v1397
      %v1974 = vsel %vm417, %v1942, %v1399
      %v1975 = vsel %vm417, %v1943, %v1401
      %v1976 = vsel %vm417, %v1944, %v1403
      %v1977 = vsel %vm417, %v1945, %v1405
      %v1978 = vsel %vm417, %v1946, %v1407
      %v1979 = vsel %vm417, %v1947, %v1409
      %v1980 = vsel %vm417, %v1948, %v1411
      %v1981 = vsel %vm417, %v1949, %v1413
      %v1982 = vsel %vm417, %v1950, %v1415
      %v1983 = vsel %vm417, %v1951, %v1417
      %v1984 = vsel %vm417, %v1952, %v1419
      %v1985 = vsel %vm417, %v1953, %v1421
      %v1986 = vsel %vm417, %v1954, %v1423
      %v1987 = vsel %vm417, %v1955, %v1425
      %v1988 = vsel %vm417, %v1956, %v1427
      %v1989 = vsel %vm417, %v1957, %v1429
      %v1990 = vsel %vm417, %v1958, %v1431
      %v1991 = vsel %vm417, %v1959, %v1433
      %v1992 = vsel %vm417, %v1960, %v1435
      %v1993 = vsel %vm417, %v1961, %v1437
      %v1994 = vsel %vm417, %v1962, %v1439
      %v1995 = vsel %vm417, %v1963, %v1441
      %v1996 = vsel %vm417, %v1964, %v1443
      %v1997 = vsel %vm417, %v1965, %v1445
      %v1998 = vsel %vm417, %v1966, %v1447
      %v1999 = vsel %vm417, %v1967, %v1449
      %v2000 = vsel %vm417, %v1968, %v1451
      %v2001 = vsel %vm417, %v1969, %v1453
      %v2002 = vsel %vm417, %v1970, %v1455
      %v2003 = vsel %vm417, %v1971, %v1457
      %vm2004 = vcmask 162816
      %v2005 = vsel %vm2004, %v1972, %v1491
      %v2006 = vsel %vm2004, %v1973, %v1493
      %v2007 = vsel %vm2004, %v1974, %v1495
      %v2008 = vsel %vm2004, %v1975, %v1497
      %v2009 = vsel %vm2004, %v1976, %v1499
      %v2010 = vsel %vm2004, %v1977, %v1501
      %v2011 = vsel %vm2004, %v1978, %v1503
      %v2012 = vsel %vm2004, %v1979, %v1505
      %v2013 = vsel %vm2004, %v1980, %v1507
      %v2014 = vsel %vm2004, %v1981, %v1509
      %v2015 = vsel %vm2004, %v1982, %v1511
      %v2016 = vsel %vm2004, %v1983, %v1513
      %v2017 = vsel %vm2004, %v1984, %v1515
      %v2018 = vsel %vm2004, %v1985, %v1517
      %v2019 = vsel %vm2004, %v1986, %v1519
      %v2020 = vsel %vm2004, %v1987, %v1521
      %v2021 = vsel %vm2004, %v1988, %v1523
      %v2022 = vsel %vm2004, %v1989, %v1525
      %v2023 = vsel %vm2004, %v1990, %v1527
      %v2024 = vsel %vm2004, %v1991, %v1529
      %v2025 = vsel %vm2004, %v1992, %v1531
      %v2026 = vsel %vm2004, %v1993, %v1533
      %v2027 = vsel %vm2004, %v1994, %v1535
      %v2028 = vsel %vm2004, %v1995, %v1537
      %v2029 = vsel %vm2004, %v1996, %v1539
      %v2030 = vsel %vm2004, %v1997, %v1541
      %v2031 = vsel %vm2004, %v1998, %v1543
      %v2032 = vsel %vm2004, %v1999, %v1545
      %v2033 = vsel %vm2004, %v2000, %v1547
      %v2034 = vsel %vm2004, %v2001, %v1549
      %v2035 = vsel %vm2004, %v2002, %v1551
      %v2036 = vsel %vm2004, %v2003, %v1553
      %vm2037 = vcmask 195584
      %v2038 = vsel %vm2037, %v2005, %v1587
      %v2039 = vsel %vm2037, %v2006, %v1589
      %v2040 = vsel %vm2037, %v2007, %v1591
      %v2041 = vsel %vm2037, %v2008, %v1593
      %v2042 = vsel %vm2037, %v2009, %v1595
      %v2043 = vsel %vm2037, %v2010, %v1597
      %v2044 = vsel %vm2037, %v2011, %v1599
      %v2045 = vsel %vm2037, %v2012, %v1601
      %v2046 = vsel %vm2037, %v2013, %v1603
      %v2047 = vsel %vm2037, %v2014, %v1605
      %v2048 = vsel %vm2037, %v2015, %v1607
      %v2049 = vsel %vm2037, %v2016, %v1609
      %v2050 = vsel %vm2037, %v2017, %v1611
      %v2051 = vsel %vm2037, %v2018, %v1613
      %v2052 = vsel %vm2037, %v2019, %v1615
      %v2053 = vsel %vm2037, %v2020, %v1617
      %v2054 = vsel %vm2037, %v2021, %v1619
      %v2055 = vsel %vm2037, %v2022, %v1621
      %v2056 = vsel %vm2037, %v2023, %v1623
      %v2057 = vsel %vm2037, %v2024, %v1625
      %v2058 = vsel %vm2037, %v2025, %v1627
      %v2059 = vsel %vm2037, %v2026, %v1629
      %v2060 = vsel %vm2037, %v2027, %v1631
      %v2061 = vsel %vm2037, %v2028, %v1633
      %v2062 = vsel %vm2037, %v2029, %v1635
      %v2063 = vsel %vm2037, %v2030, %v1637
      %v2064 = vsel %vm2037, %v2031, %v1639
      %v2065 = vsel %vm2037, %v2032, %v1641
      %v2066 = vsel %vm2037, %v2033, %v1643
      %v2067 = vsel %vm2037, %v2034, %v1645
      %v2068 = vsel %vm2037, %v2035, %v1647
      %v2069 = vsel %vm2037, %v2036, %v1649
      %vm2070 = vcmask 228352
      %v2071 = vsel %vm2070, %v2038, %v1683
      %v2072 = vsel %vm2070, %v2039, %v1685
      %v2073 = vsel %vm2070, %v2040, %v1687
      %v2074 = vsel %vm2070, %v2041, %v1689
      %v2075 = vsel %vm2070, %v2042, %v1691
      %v2076 = vsel %vm2070, %v2043, %v1693
      %v2077 = vsel %vm2070, %v2044, %v1695
      %v2078 = vsel %vm2070, %v2045, %v1697
      %v2079 = vsel %vm2070, %v2046, %v1699
      %v2080 = vsel %vm2070, %v2047, %v1701
      %v2081 = vsel %vm2070, %v2048, %v1703
      %v2082 = vsel %vm2070, %v2049, %v1705
      %v2083 = vsel %vm2070, %v2050, %v1707
      %v2084 = vsel %vm2070, %v2051, %v1709
      %v2085 = vsel %vm2070, %v2052, %v1711
      %v2086 = vsel %vm2070, %v2053, %v1713
      %v2087 = vsel %vm2070, %v2054, %v1715
      %v2088 = vsel %vm2070, %v2055, %v1717
      %v2089 = vsel %vm2070, %v2056, %v1719
      %v2090 = vsel %vm2070, %v2057, %v1721
      %v2091 = vsel %vm2070, %v2058, %v1723
      %v2092 = vsel %vm2070, %v2059, %v1725
      %v2093 = vsel %vm2070, %v2060, %v1727
      %v2094 = vsel %vm2070, %v2061, %v1729
      %v2095 = vsel %vm2070, %v2062, %v1731
      %v2096 = vsel %vm2070, %v2063, %v1733
      %v2097 = vsel %vm2070, %v2064, %v1735
      %v2098 = vsel %vm2070, %v2065, %v1737
      %v2099 = vsel %vm2070, %v2066, %v1739
      %v2100 = vsel %vm2070, %v2067, %v1741
      %v2101 = vsel %vm2070, %v2068, %v1743
      %v2102 = vsel %vm2070, %v2069, %v1745
      %vm2103 = vcmask 261120
      %v2104 = vsel %vm2103, %v2071, %v1779
      %v2105 = vsel %vm2103, %v2072, %v1781
      %v2106 = vsel %vm2103, %v2073, %v1783
      %v2107 = vsel %vm2103, %v2074, %v1785
      %v2108 = vsel %vm2103, %v2075, %v1787
      %v2109 = vsel %vm2103, %v2076, %v1789
      %v2110 = vsel %vm2103, %v2077, %v1791
      %v2111 = vsel %vm2103, %v2078, %v1793
      %v2112 = vsel %vm2103, %v2079, %v1795
      %v2113 = vsel %vm2103, %v2080, %v1797
      %v2114 = vsel %vm2103, %v2081, %v1799
      %v2115 = vsel %vm2103, %v2082, %v1801
      %v2116 = vsel %vm2103, %v2083, %v1803
      %v2117 = vsel %vm2103, %v2084, %v1805
      %v2118 = vsel %vm2103, %v2085, %v1807
      %v2119 = vsel %vm2103, %v2086, %v1809
      %v2120 = vsel %vm2103, %v2087, %v1811
      %v2121 = vsel %vm2103, %v2088, %v1813
      %v2122 = vsel %vm2103, %v2089, %v1815
      %v2123 = vsel %vm2103, %v2090, %v1817
      %v2124 = vsel %vm2103, %v2091, %v1819
      %v2125 = vsel %vm2103, %v2092, %v1821
      %v2126 = vsel %vm2103, %v2093, %v1823
      %v2127 = vsel %vm2103, %v2094, %v1825
      %v2128 = vsel %vm2103, %v2095, %v1827
      %v2129 = vsel %vm2103, %v2096, %v1829
      %v2130 = vsel %vm2103, %v2097, %v1831
      %v2131 = vsel %vm2103, %v2098, %v1833
      %v2132 = vsel %vm2103, %v2099, %v1835
      %v2133 = vsel %vm2103, %v2100, %v1837
      %v2134 = vsel %vm2103, %v2101, %v1839
      %v2135 = vsel %vm2103, %v2102, %v1841
      %v2136 = vpack.c.bf16 %v2105, %v2104
      %v2137 = vpack.c.bf16 %v2107, %v2106
      %v2138 = vpack.c.bf16 %v2109, %v2108
      %v2139 = vpack.c.bf16 %v2111, %v2110
      %v2140 = vpack.c.bf16 %v2113, %v2112
      %v2141 = vpack.c.bf16 %v2115, %v2114
      %v2142 = vpack.c.bf16 %v2117, %v2116
      %v2143 = vpack.c.bf16 %v2119, %v2118
      %v2144 = vpack.c.bf16 %v2121, %v2120
      %v2145 = vpack.c.bf16 %v2123, %v2122
      %v2146 = vpack.c.bf16 %v2125, %v2124
      %v2147 = vpack.c.bf16 %v2127, %v2126
      %v2148 = vpack.c.bf16 %v2129, %v2128
      %v2149 = vpack.c.bf16 %v2131, %v2130
      %v2150 = vpack.c.bf16 %v2133, %v2132
      %v2151 = vpack.c.bf16 %v2135, %v2134
      %v2152 = vld [vmem:[%s4] sm:$0xf]
      %v2153 = vld [vmem:[%s4 + $0x4] sm:$0xf]
      %v2154 = vld [vmem:[%s4 + $0x8] sm:$0xf]
      %v2155 = vld [vmem:[%s4 + $0xc] sm:$0xf]
      %v2156 = vld [vmem:[%s4 + $0x10] sm:$0x3]
      %v2162 = vunpack.c.l.b16 %v2152
      %v2163 = vunpack.c.l.b16 %v2153
      %v2164 = vunpack.c.l.b16 %v2154
      %v2165 = vunpack.c.l.b16 %v2155
      %v2166 = vunpack.c.l.b16 %v2156
      %v2167 = vpack.c.b16 %v2163, %v2162
      %v2168 = vpack.c.b16 %v2165, %v2164
      %v2169 = vpack.c.b16 %v2166, %v2166
      %vm2172 = vcmask 293888
      %v2174 = vsel %vm2172, %v2136, 0
      %v2177 = vsel %vm2172, %v2137, 0
      %v2180 = vsel %vm2172, %v2138, 0
      %v2183 = vsel %vm2172, %v2139, 0
      %v2186 = vsel %vm2172, %v2140, 0
      %v2189 = vsel %vm2172, %v2141, 0
      %v2192 = vsel %vm2172, %v2142, 0
      %v2195 = vsel %vm2172, %v2143, 0
      %v2198 = vsel %vm2172, %v2144, 0
      %v2201 = vsel %vm2172, %v2145, 0
      %v2204 = vsel %vm2172, %v2146, 0
      %v2207 = vsel %vm2172, %v2147, 0
      %v2210 = vsel %vm2172, %v2148, 0
      %v2213 = vsel %vm2172, %v2149, 0
      %v2216 = vsel %vm2172, %v2150, 0
      %v2219 = vsel %vm2172, %v2151, 0
      %vm2221 = vcmask 1041408
      %v2223 = vsel %vm2221, %v2169, 0
      %2225 = vmatprep.subr.bf16.mxu0 0
      %2226 = vmatpush1.bf16.msra.mxu0 0
      %2227 = vmatprep.subr.bf16.mxu0 0
      %2228 = vmatpush1.bf16.msra.mxu0 0
      %2229 = vmatprep.subr.bf16.mxu0 0
      %2230 = vmatpush1.bf16.msra.mxu0 0
      %2231 = vmatprep.subr.bf16.mxu0 0
      %2232 = vmatpush1.bf16.msra.mxu0 0
      %2233 = vmatprep.subr.bf16.mxu0 0
      %2234 = vmatpush1.bf16.msra.mxu0 0
      %2235 = vmatprep.subr.bf16.mxu0 0
      %2236 = vmatpush1.bf16.msra.mxu0 %v2223
      %2237 = vmatprep.subr.bf16.mxu0 0
      %2238 = vmatpush1.bf16.msra.mxu0 %v2168
      %2239 = vmatprep.subr.bf16.mxu0 0
      %2240 = vmatpush1.bf16.msra.mxu0 %v2167
      %2241 = vmatprep.subr.bf16.mxu0 0
      %2242 = vmatpush2.bf16.msra.mxu0 0
      %2243 = vmatprep.subr.bf16.mxu0 0
      %2244 = vmatpush2.bf16.msra.mxu0 0
      %2245 = vmatprep.subr.bf16.mxu0 0
      %2246 = vmatpush2.bf16.msra.mxu0 0
      %2247 = vmatprep.subr.bf16.mxu0 0
      %2248 = vmatpush2.bf16.msra.mxu0 0
      %2249 = vmatprep.subr.bf16.mxu0 0
      %2250 = vmatpush2.bf16.msra.mxu0 0
      %2251 = vmatprep.subr.bf16.mxu0 0
      %2252 = vmatpush2.bf16.msra.mxu0 0
      %2253 = vmatprep.subr.bf16.mxu0 0
      %2254 = vmatpush2.bf16.msra.mxu0 0
      %2255 = vmatprep.subr.bf16.mxu0 0
      %2256 = vmatpush2.bf16.msra.mxu0 0
      %2257 = vmatprep.mubr.bf16.mxu0 0
      %2258 = vmatmul.mubr.bf16.gmra.mxu0 %v2174
      %v2259 = vpop.f32.mrf.mxu0
      %v2260 = vadd.f32 0.0, %v2259
      %v2261 = vpop.f32.mrf.mxu0
      %v2262 = vpop.f32.mrf.mxu0
      %v2263 = vadd.f32 0.0, %v2262
      %v2264 = vpop.f32.mrf.mxu0
      %2265 = vmatprep.mubr.bf16.mxu0 0
      %2266 = vmatmul.mubr.bf16.gmra.mxu0 %v2177
      %v2267 = vpop.f32.mrf.mxu0
      %v2268 = vadd.f32 0.0, %v2267
      %v2269 = vpop.f32.mrf.mxu0
      %v2270 = vpop.f32.mrf.mxu0
      %v2271 = vadd.f32 0.0, %v2270
      %v2272 = vpop.f32.mrf.mxu0
      %2273 = vmatprep.mubr.bf16.mxu0 0
      %2274 = vmatmul.mubr.bf16.gmra.mxu0 %v2180
      %v2275 = vpop.f32.mrf.mxu0
      %v2276 = vadd.f32 0.0, %v2275
      %v2277 = vpop.f32.mrf.mxu0
      %v2278 = vpop.f32.mrf.mxu0
      %v2279 = vadd.f32 0.0, %v2278
      %v2280 = vpop.f32.mrf.mxu0
      %2281 = vmatprep.mubr.bf16.mxu0 0
      %2282 = vmatmul.mubr.bf16.gmra.mxu0 %v2183
      %v2283 = vpop.f32.mrf.mxu0
      %v2284 = vadd.f32 0.0, %v2283
      %v2285 = vpop.f32.mrf.mxu0
      %v2286 = vpop.f32.mrf.mxu0
      %v2287 = vadd.f32 0.0, %v2286
      %v2288 = vpop.f32.mrf.mxu0
      %2289 = vmatprep.mubr.bf16.mxu0 0
      %2290 = vmatmul.mubr.bf16.gmra.mxu0 %v2186
      %v2291 = vpop.f32.mrf.mxu0
      %v2292 = vadd.f32 0.0, %v2291
      %v2293 = vpop.f32.mrf.mxu0
      %v2294 = vpop.f32.mrf.mxu0
      %v2295 = vadd.f32 0.0, %v2294
      %v2296 = vpop.f32.mrf.mxu0
      %2297 = vmatprep.mubr.bf16.mxu0 0
      %2298 = vmatmul.mubr.bf16.gmra.mxu0 %v2189
      %v2299 = vpop.f32.mrf.mxu0
      %v2300 = vadd.f32 0.0, %v2299
      %v2301 = vpop.f32.mrf.mxu0
      %v2302 = vpop.f32.mrf.mxu0
      %v2303 = vadd.f32 0.0, %v2302
      %v2304 = vpop.f32.mrf.mxu0
      %2305 = vmatprep.mubr.bf16.mxu0 0
      %2306 = vmatmul.mubr.bf16.gmra.mxu0 %v2192
      %v2307 = vpop.f32.mrf.mxu0
      %v2308 = vadd.f32 0.0, %v2307
      %v2309 = vpop.f32.mrf.mxu0
      %v2310 = vpop.f32.mrf.mxu0
      %v2311 = vadd.f32 0.0, %v2310
      %v2312 = vpop.f32.mrf.mxu0
      %2313 = vmatprep.mubr.bf16.mxu0 0
      %2314 = vmatmul.mubr.bf16.gmra.mxu0 %v2195
      %v2315 = vpop.f32.mrf.mxu0
      %v2316 = vadd.f32 0.0, %v2315
      %v2317 = vpop.f32.mrf.mxu0
      %v2318 = vpop.f32.mrf.mxu0
      %v2319 = vadd.f32 0.0, %v2318
      %v2320 = vpop.f32.mrf.mxu0
      %2321 = vmatprep.mubr.bf16.mxu0 0
      %2322 = vmatmul.mubr.bf16.gmra.mxu0 %v2198
      %v2323 = vpop.f32.mrf.mxu0
      %v2324 = vadd.f32 0.0, %v2323
      %v2325 = vpop.f32.mrf.mxu0
      %v2326 = vpop.f32.mrf.mxu0
      %v2327 = vadd.f32 0.0, %v2326
      %v2328 = vpop.f32.mrf.mxu0
      %2329 = vmatprep.mubr.bf16.mxu0 0
      %2330 = vmatmul.mubr.bf16.gmra.mxu0 %v2201
      %v2331 = vpop.f32.mrf.mxu0
      %v2332 = vadd.f32 0.0, %v2331
      %v2333 = vpop.f32.mrf.mxu0
      %v2334 = vpop.f32.mrf.mxu0
      %v2335 = vadd.f32 0.0, %v2334
      %v2336 = vpop.f32.mrf.mxu0
      %2337 = vmatprep.mubr.bf16.mxu0 0
      %2338 = vmatmul.mubr.bf16.gmra.mxu0 %v2204
      %v2339 = vpop.f32.mrf.mxu0
      %v2340 = vadd.f32 0.0, %v2339
      %v2341 = vpop.f32.mrf.mxu0
      %v2342 = vpop.f32.mrf.mxu0
      %v2343 = vadd.f32 0.0, %v2342
      %v2344 = vpop.f32.mrf.mxu0
      %2345 = vmatprep.mubr.bf16.mxu0 0
      %2346 = vmatmul.mubr.bf16.gmra.mxu0 %v2207
      %v2347 = vpop.f32.mrf.mxu0
      %v2348 = vadd.f32 0.0, %v2347
      %v2349 = vpop.f32.mrf.mxu0
      %v2350 = vpop.f32.mrf.mxu0
      %v2351 = vadd.f32 0.0, %v2350
      %v2352 = vpop.f32.mrf.mxu0
      %2353 = vmatprep.mubr.bf16.mxu0 0
      %2354 = vmatmul.mubr.bf16.gmra.mxu0 %v2210
      %v2355 = vpop.f32.mrf.mxu0
      %v2356 = vadd.f32 0.0, %v2355
      %v2357 = vpop.f32.mrf.mxu0
      %v2358 = vpop.f32.mrf.mxu0
      %v2359 = vadd.f32 0.0, %v2358
      %v2360 = vpop.f32.mrf.mxu0
      %2361 = vmatprep.mubr.bf16.mxu0 0
      %2362 = vmatmul.mubr.bf16.gmra.mxu0 %v2213
      %v2363 = vpop.f32.mrf.mxu0
      %v2364 = vadd.f32 0.0, %v2363
      %v2365 = vpop.f32.mrf.mxu0
      %v2366 = vpop.f32.mrf.mxu0
      %v2367 = vadd.f32 0.0, %v2366
      %v2368 = vpop.f32.mrf.mxu0
      %2369 = vmatprep.mubr.bf16.mxu0 0
      %2370 = vmatmul.mubr.bf16.gmra.mxu0 %v2216
      %v2371 = vpop.f32.mrf.mxu0
      %v2372 = vadd.f32 0.0, %v2371
      %v2373 = vpop.f32.mrf.mxu0
      %v2374 = vpop.f32.mrf.mxu0
      %v2375 = vadd.f32 0.0, %v2374
      %v2376 = vpop.f32.mrf.mxu0
      %2377 = vmatprep.mubr.bf16.mxu0 0
      %2378 = vmatmul.mubr.bf16.gmra.mxu0 %v2219
      %v2379 = vpop.f32.mrf.mxu0
      %v2380 = vadd.f32 0.0, %v2379
      %v2381 = vpop.f32.mrf.mxu0
      %v2382 = vpop.f32.mrf.mxu0
      %v2383 = vadd.f32 0.0, %v2382
      %v2384 = vpop.f32.mrf.mxu0
      %2385 = vdwg.mxu0
      %v2386 = vld [vmem:[%s5] sm:$0x1]
      %v2388 = vlaneseq
      %v2389 = vshrl.u32 %v2388, 7
      %v2390 = vsub.s32 0, %v2389
      %v2391 = vrot.slane %v2386, %v2390
      %v2393 = vmul.f32 %v2260, %v2391
      %v2394 = vmul.f32 %v2263, %v2391
      %v2395 = vmul.f32 %v2268, %v2391
      %v2396 = vmul.f32 %v2271, %v2391
      %v2397 = vmul.f32 %v2276, %v2391
      %v2398 = vmul.f32 %v2279, %v2391
      %v2399 = vmul.f32 %v2284, %v2391
      %v2400 = vmul.f32 %v2287, %v2391
      %v2401 = vmul.f32 %v2292, %v2391
      %v2402 = vmul.f32 %v2295, %v2391
      %v2403 = vmul.f32 %v2300, %v2391
      %v2404 = vmul.f32 %v2303, %v2391
      %v2405 = vmul.f32 %v2308, %v2391
      %v2406 = vmul.f32 %v2311, %v2391
      %v2407 = vmul.f32 %v2316, %v2391
      %v2408 = vmul.f32 %v2319, %v2391
      %v2409 = vmul.f32 %v2324, %v2391
      %v2410 = vmul.f32 %v2327, %v2391
      %v2411 = vmul.f32 %v2332, %v2391
      %v2412 = vmul.f32 %v2335, %v2391
      %v2413 = vmul.f32 %v2340, %v2391
      %v2414 = vmul.f32 %v2343, %v2391
      %v2415 = vmul.f32 %v2348, %v2391
      %v2416 = vmul.f32 %v2351, %v2391
      %v2417 = vmul.f32 %v2356, %v2391
      %v2418 = vmul.f32 %v2359, %v2391
      %v2419 = vmul.f32 %v2364, %v2391
      %v2420 = vmul.f32 %v2367, %v2391
      %v2421 = vmul.f32 %v2372, %v2391
      %v2422 = vmul.f32 %v2375, %v2391
      %v2423 = vmul.f32 %v2380, %v2391
      %v2424 = vmul.f32 %v2383, %v2391
      %v2425 = vld [vmem:[%s6] sm:$0x1]
      %v2427 = vlaneseq
      %v2428 = vshrl.u32 %v2427, 7
      %v2429 = vsub.s32 0, %v2428
      %v2430 = vrot.slane %v2425, %v2429
      %v2432 = vadd.f32 %v2393, %v2430
      %v2433 = vadd.f32 %v2394, %v2430
      %v2434 = vadd.f32 %v2395, %v2430
      %v2435 = vadd.f32 %v2396, %v2430
      %v2436 = vadd.f32 %v2397, %v2430
      %v2437 = vadd.f32 %v2398, %v2430
      %v2438 = vadd.f32 %v2399, %v2430
      %v2439 = vadd.f32 %v2400, %v2430
      %v2440 = vadd.f32 %v2401, %v2430
      %v2441 = vadd.f32 %v2402, %v2430
      %v2442 = vadd.f32 %v2403, %v2430
      %v2443 = vadd.f32 %v2404, %v2430
      %v2444 = vadd.f32 %v2405, %v2430
      %v2445 = vadd.f32 %v2406, %v2430
      %v2446 = vadd.f32 %v2407, %v2430
      %v2447 = vadd.f32 %v2408, %v2430
      %v2448 = vadd.f32 %v2409, %v2430
      %v2449 = vadd.f32 %v2410, %v2430
      %v2450 = vadd.f32 %v2411, %v2430
      %v2451 = vadd.f32 %v2412, %v2430
      %v2452 = vadd.f32 %v2413, %v2430
      %v2453 = vadd.f32 %v2414, %v2430
      %v2454 = vadd.f32 %v2415, %v2430
      %v2455 = vadd.f32 %v2416, %v2430
      %v2456 = vadd.f32 %v2417, %v2430
      %v2457 = vadd.f32 %v2418, %v2430
      %v2458 = vadd.f32 %v2419, %v2430
      %v2459 = vadd.f32 %v2420, %v2430
      %v2460 = vadd.f32 %v2421, %v2430
      %v2461 = vadd.f32 %v2422, %v2430
      %v2462 = vadd.f32 %v2423, %v2430
      %v2463 = vadd.f32 %v2424, %v2430
      %v2464 = vmax.f32 %v2432, 0.0
      %v2465 = vmax.f32 %v2433, 0.0
      %v2466 = vmax.f32 %v2434, 0.0
      %v2467 = vmax.f32 %v2435, 0.0
      %v2468 = vmax.f32 %v2436, 0.0
      %v2469 = vmax.f32 %v2437, 0.0
      %v2470 = vmax.f32 %v2438, 0.0
      %v2471 = vmax.f32 %v2439, 0.0
      %v2472 = vmax.f32 %v2440, 0.0
      %v2473 = vmax.f32 %v2441, 0.0
      %v2474 = vmax.f32 %v2442, 0.0
      %v2475 = vmax.f32 %v2443, 0.0
      %v2476 = vmax.f32 %v2444, 0.0
      %v2477 = vmax.f32 %v2445, 0.0
      %v2478 = vmax.f32 %v2446, 0.0
      %v2479 = vmax.f32 %v2447, 0.0
      %v2480 = vmax.f32 %v2448, 0.0
      %v2481 = vmax.f32 %v2449, 0.0
      %v2482 = vmax.f32 %v2450, 0.0
      %v2483 = vmax.f32 %v2451, 0.0
      %v2484 = vmax.f32 %v2452, 0.0
      %v2485 = vmax.f32 %v2453, 0.0
      %v2486 = vmax.f32 %v2454, 0.0
      %v2487 = vmax.f32 %v2455, 0.0
      %v2488 = vmax.f32 %v2456, 0.0
      %v2489 = vmax.f32 %v2457, 0.0
      %v2490 = vmax.f32 %v2458, 0.0
      %v2491 = vmax.f32 %v2459, 0.0
      %v2492 = vmax.f32 %v2460, 0.0
      %v2493 = vmax.f32 %v2461, 0.0
      %v2494 = vmax.f32 %v2462, 0.0
      %v2495 = vmax.f32 %v2463, 0.0
      %v2496 = vpack.c.bf16 %v2465, %v2464
      %v2497 = vpack.c.bf16 %v2467, %v2466
      %v2498 = vpack.c.bf16 %v2469, %v2468
      %v2499 = vpack.c.bf16 %v2471, %v2470
      %v2500 = vpack.c.bf16 %v2473, %v2472
      %v2501 = vpack.c.bf16 %v2475, %v2474
      %v2502 = vpack.c.bf16 %v2477, %v2476
      %v2503 = vpack.c.bf16 %v2479, %v2478
      %v2504 = vpack.c.bf16 %v2481, %v2480
      %v2505 = vpack.c.bf16 %v2483, %v2482
      %v2506 = vpack.c.bf16 %v2485, %v2484
      %v2507 = vpack.c.bf16 %v2487, %v2486
      %v2508 = vpack.c.bf16 %v2489, %v2488
      %v2509 = vpack.c.bf16 %v2491, %v2490
      %v2510 = vpack.c.bf16 %v2493, %v2492
      %v2511 = vpack.c.bf16 %v2495, %v2494
      %v2512 = vld [vmem:[%s7] sm:$0x3]
      %v2514 = vsel %vm737, %v2496, 0
      %v2517 = vsel %vm737, %v2497, 0
      %v2520 = vsel %vm737, %v2498, 0
      %v2523 = vsel %vm737, %v2499, 0
      %v2526 = vsel %vm737, %v2500, 0
      %v2529 = vsel %vm737, %v2501, 0
      %v2532 = vsel %vm737, %v2502, 0
      %v2535 = vsel %vm737, %v2503, 0
      %v2538 = vsel %vm737, %v2504, 0
      %v2541 = vsel %vm737, %v2505, 0
      %v2544 = vsel %vm737, %v2506, 0
      %v2547 = vsel %vm737, %v2507, 0
      %v2550 = vsel %vm737, %v2508, 0
      %v2553 = vsel %vm737, %v2509, 0
      %v2556 = vsel %vm737, %v2510, 0
      %v2559 = vsel %vm737, %v2511, 0
      %v2562 = vsel %vm2221, %v2512, 0
      %2564 = vmatprep.subr.bf16.mxu0 0
      %2565 = vmatpush1.bf16.msra.mxu0 0
      %2566 = vmatprep.subr.bf16.mxu0 0
      %2567 = vmatpush1.bf16.msra.mxu0 0
      %2568 = vmatprep.subr.bf16.mxu0 0
      %2569 = vmatpush1.bf16.msra.mxu0 0
      %2570 = vmatprep.subr.bf16.mxu0 0
      %2571 = vmatpush1.bf16.msra.mxu0 0
      %2572 = vmatprep.subr.bf16.mxu0 0
      %2573 = vmatpush1.bf16.msra.mxu0 0
      %2574 = vmatprep.subr.bf16.mxu0 0
      %2575 = vmatpush1.bf16.msra.mxu0 0
      %2576 = vmatprep.subr.bf16.mxu0 0
      %2577 = vmatpush1.bf16.msra.mxu0 0
      %2578 = vmatprep.subr.bf16.mxu0 0
      %2579 = vmatpush1.bf16.msra.mxu0 %v2562
      %2580 = vmatprep.subr.bf16.mxu0 0
      %2581 = vmatpush2.bf16.msra.mxu0 0
      %2582 = vmatprep.subr.bf16.mxu0 0
      %2583 = vmatpush2.bf16.msra.mxu0 0
      %2584 = vmatprep.subr.bf16.mxu0 0
      %2585 = vmatpush2.bf16.msra.mxu0 0
      %2586 = vmatprep.subr.bf16.mxu0 0
      %2587 = vmatpush2.bf16.msra.mxu0 0
      %2588 = vmatprep.subr.bf16.mxu0 0
      %2589 = vmatpush2.bf16.msra.mxu0 0
      %2590 = vmatprep.subr.bf16.mxu0 0
      %2591 = vmatpush2.bf16.msra.mxu0 0
      %2592 = vmatprep.subr.bf16.mxu0 0
      %2593 = vmatpush2.bf16.msra.mxu0 0
      %2594 = vmatprep.subr.bf16.mxu0 0
      %2595 = vmatpush2.bf16.msra.mxu0 0
      %2596 = vmatprep.mubr.bf16.mxu0 0
      %2597 = vmatmul.mubr.bf16.gmra.mxu0 %v2514
      %v2598 = vpop.f32.mrf.mxu0
      %v2599 = vadd.f32 0.0, %v2598
      %v2600 = vpop.f32.mrf.mxu0
      %v2601 = vpop.f32.mrf.mxu0
      %v2602 = vadd.f32 0.0, %v2601
      %v2603 = vpop.f32.mrf.mxu0
      %2604 = vmatprep.mubr.bf16.mxu0 0
      %2605 = vmatmul.mubr.bf16.gmra.mxu0 %v2517
      %v2606 = vpop.f32.mrf.mxu0
      %v2607 = vadd.f32 0.0, %v2606
      %v2608 = vpop.f32.mrf.mxu0
      %v2609 = vpop.f32.mrf.mxu0
      %v2610 = vadd.f32 0.0, %v2609
      %v2611 = vpop.f32.mrf.mxu0
      %2612 = vmatprep.mubr.bf16.mxu0 0
      %2613 = vmatmul.mubr.bf16.gmra.mxu0 %v2520
      %v2614 = vpop.f32.mrf.mxu0
      %v2615 = vadd.f32 0.0, %v2614
      %v2616 = vpop.f32.mrf.mxu0
      %v2617 = vpop.f32.mrf.mxu0
      %v2618 = vadd.f32 0.0, %v2617
      %v2619 = vpop.f32.mrf.mxu0
      %2620 = vmatprep.mubr.bf16.mxu0 0
      %2621 = vmatmul.mubr.bf16.gmra.mxu0 %v2523
      %v2622 = vpop.f32.mrf.mxu0
      %v2623 = vadd.f32 0.0, %v2622
      %v2624 = vpop.f32.mrf.mxu0
      %v2625 = vpop.f32.mrf.mxu0
      %v2626 = vadd.f32 0.0, %v2625
      %v2627 = vpop.f32.mrf.mxu0
      %2628 = vmatprep.mubr.bf16.mxu0 0
      %2629 = vmatmul.mubr.bf16.gmra.mxu0 %v2526
      %v2630 = vpop.f32.mrf.mxu0
      %v2631 = vadd.f32 0.0, %v2630
      %v2632 = vpop.f32.mrf.mxu0
      %v2633 = vpop.f32.mrf.mxu0
      %v2634 = vadd.f32 0.0, %v2633
      %v2635 = vpop.f32.mrf.mxu0
      %2636 = vmatprep.mubr.bf16.mxu0 0
      %2637 = vmatmul.mubr.bf16.gmra.mxu0 %v2529
      %v2638 = vpop.f32.mrf.mxu0
      %v2639 = vadd.f32 0.0, %v2638
      %v2640 = vpop.f32.mrf.mxu0
      %v2641 = vpop.f32.mrf.mxu0
      %v2642 = vadd.f32 0.0, %v2641
      %v2643 = vpop.f32.mrf.mxu0
      %2644 = vmatprep.mubr.bf16.mxu0 0
      %2645 = vmatmul.mubr.bf16.gmra.mxu0 %v2532
      %v2646 = vpop.f32.mrf.mxu0
      %v2647 = vadd.f32 0.0, %v2646
      %v2648 = vpop.f32.mrf.mxu0
      %v2649 = vpop.f32.mrf.mxu0
      %v2650 = vadd.f32 0.0, %v2649
      %v2651 = vpop.f32.mrf.mxu0
      %2652 = vmatprep.mubr.bf16.mxu0 0
      %2653 = vmatmul.mubr.bf16.gmra.mxu0 %v2535
      %v2654 = vpop.f32.mrf.mxu0
      %v2655 = vadd.f32 0.0, %v2654
      %v2656 = vpop.f32.mrf.mxu0
      %v2657 = vpop.f32.mrf.mxu0
      %v2658 = vadd.f32 0.0, %v2657
      %v2659 = vpop.f32.mrf.mxu0
      %2660 = vmatprep.mubr.bf16.mxu0 0
      %2661 = vmatmul.mubr.bf16.gmra.mxu0 %v2538
      %v2662 = vpop.f32.mrf.mxu0
      %v2663 = vadd.f32 0.0, %v2662
      %v2664 = vpop.f32.mrf.mxu0
      %v2665 = vpop.f32.mrf.mxu0
      %v2666 = vadd.f32 0.0, %v2665
      %v2667 = vpop.f32.mrf.mxu0
      %2668 = vmatprep.mubr.bf16.mxu0 0
      %2669 = vmatmul.mubr.bf16.gmra.mxu0 %v2541
      %v2670 = vpop.f32.mrf.mxu0
      %v2671 = vadd.f32 0.0, %v2670
      %v2672 = vpop.f32.mrf.mxu0
      %v2673 = vpop.f32.mrf.mxu0
      %v2674 = vadd.f32 0.0, %v2673
      %v2675 = vpop.f32.mrf.mxu0
      %2676 = vmatprep.mubr.bf16.mxu0 0
      %2677 = vmatmul.mubr.bf16.gmra.mxu0 %v2544
      %v2678 = vpop.f32.mrf.mxu0
      %v2679 = vadd.f32 0.0, %v2678
      %v2680 = vpop.f32.mrf.mxu0
      %v2681 = vpop.f32.mrf.mxu0
      %v2682 = vadd.f32 0.0, %v2681
      %v2683 = vpop.f32.mrf.mxu0
      %2684 = vmatprep.mubr.bf16.mxu0 0
      %2685 = vmatmul.mubr.bf16.gmra.mxu0 %v2547
      %v2686 = vpop.f32.mrf.mxu0
      %v2687 = vadd.f32 0.0, %v2686
      %v2688 = vpop.f32.mrf.mxu0
      %v2689 = vpop.f32.mrf.mxu0
      %v2690 = vadd.f32 0.0, %v2689
      %v2691 = vpop.f32.mrf.mxu0
      %2692 = vmatprep.mubr.bf16.mxu0 0
      %2693 = vmatmul.mubr.bf16.gmra.mxu0 %v2550
      %v2694 = vpop.f32.mrf.mxu0
      %v2695 = vadd.f32 0.0, %v2694
      %v2696 = vpop.f32.mrf.mxu0
      %v2697 = vpop.f32.mrf.mxu0
      %v2698 = vadd.f32 0.0, %v2697
      %v2699 = vpop.f32.mrf.mxu0
      %2700 = vmatprep.mubr.bf16.mxu0 0
      %2701 = vmatmul.mubr.bf16.gmra.mxu0 %v2553
      %v2702 = vpop.f32.mrf.mxu0
      %v2703 = vadd.f32 0.0, %v2702
      %v2704 = vpop.f32.mrf.mxu0
      %v2705 = vpop.f32.mrf.mxu0
      %v2706 = vadd.f32 0.0, %v2705
      %v2707 = vpop.f32.mrf.mxu0
      %2708 = vmatprep.mubr.bf16.mxu0 0
      %2709 = vmatmul.mubr.bf16.gmra.mxu0 %v2556
      %v2710 = vpop.f32.mrf.mxu0
      %v2711 = vadd.f32 0.0, %v2710
      %v2712 = vpop.f32.mrf.mxu0
      %v2713 = vpop.f32.mrf.mxu0
      %v2714 = vadd.f32 0.0, %v2713
      %v2715 = vpop.f32.mrf.mxu0
      %2716 = vmatprep.mubr.bf16.mxu0 0
      %2717 = vmatmul.mubr.bf16.gmra.mxu0 %v2559
      %v2718 = vpop.f32.mrf.mxu0
      %v2719 = vadd.f32 0.0, %v2718
      %v2720 = vpop.f32.mrf.mxu0
      %v2721 = vpop.f32.mrf.mxu0
      %v2722 = vadd.f32 0.0, %v2721
      %v2723 = vpop.f32.mrf.mxu0
      %2724 = vdwg.mxu0
      %v2725 = vld [vmem:[%s8] sm:$0x1]
      %v2727 = vlaneseq
      %v2728 = vshrl.u32 %v2727, 7
      %v2729 = vsub.s32 0, %v2728
      %v2730 = vrot.slane %v2725, %v2729
      %v2732 = vmul.f32 %v2599, %v2730
      %v2733 = vmul.f32 %v2602, %v2730
      %v2734 = vmul.f32 %v2607, %v2730
      %v2735 = vmul.f32 %v2610, %v2730
      %v2736 = vmul.f32 %v2615, %v2730
      %v2737 = vmul.f32 %v2618, %v2730
      %v2738 = vmul.f32 %v2623, %v2730
      %v2739 = vmul.f32 %v2626, %v2730
      %v2740 = vmul.f32 %v2631, %v2730
      %v2741 = vmul.f32 %v2634, %v2730
      %v2742 = vmul.f32 %v2639, %v2730
      %v2743 = vmul.f32 %v2642, %v2730
      %v2744 = vmul.f32 %v2647, %v2730
      %v2745 = vmul.f32 %v2650, %v2730
      %v2746 = vmul.f32 %v2655, %v2730
      %v2747 = vmul.f32 %v2658, %v2730
      %v2748 = vmul.f32 %v2663, %v2730
      %v2749 = vmul.f32 %v2666, %v2730
      %v2750 = vmul.f32 %v2671, %v2730
      %v2751 = vmul.f32 %v2674, %v2730
      %v2752 = vmul.f32 %v2679, %v2730
      %v2753 = vmul.f32 %v2682, %v2730
      %v2754 = vmul.f32 %v2687, %v2730
      %v2755 = vmul.f32 %v2690, %v2730
      %v2756 = vmul.f32 %v2695, %v2730
      %v2757 = vmul.f32 %v2698, %v2730
      %v2758 = vmul.f32 %v2703, %v2730
      %v2759 = vmul.f32 %v2706, %v2730
      %v2760 = vmul.f32 %v2711, %v2730
      %v2761 = vmul.f32 %v2714, %v2730
      %v2762 = vmul.f32 %v2719, %v2730
      %v2763 = vmul.f32 %v2722, %v2730
      %v2764 = vld [vmem:[%s9] sm:$0x1]
      %v2766 = vlaneseq
      %v2767 = vshrl.u32 %v2766, 7
      %v2768 = vsub.s32 0, %v2767
      %v2769 = vrot.slane %v2764, %v2768
      %v2771 = vadd.f32 %v2732, %v2769
      %v2772 = vadd.f32 %v2733, %v2769
      %v2773 = vadd.f32 %v2734, %v2769
      %v2774 = vadd.f32 %v2735, %v2769
      %v2775 = vadd.f32 %v2736, %v2769
      %v2776 = vadd.f32 %v2737, %v2769
      %v2777 = vadd.f32 %v2738, %v2769
      %v2778 = vadd.f32 %v2739, %v2769
      %v2779 = vadd.f32 %v2740, %v2769
      %v2780 = vadd.f32 %v2741, %v2769
      %v2781 = vadd.f32 %v2742, %v2769
      %v2782 = vadd.f32 %v2743, %v2769
      %v2783 = vadd.f32 %v2744, %v2769
      %v2784 = vadd.f32 %v2745, %v2769
      %v2785 = vadd.f32 %v2746, %v2769
      %v2786 = vadd.f32 %v2747, %v2769
      %v2787 = vadd.f32 %v2748, %v2769
      %v2788 = vadd.f32 %v2749, %v2769
      %v2789 = vadd.f32 %v2750, %v2769
      %v2790 = vadd.f32 %v2751, %v2769
      %v2791 = vadd.f32 %v2752, %v2769
      %v2792 = vadd.f32 %v2753, %v2769
      %v2793 = vadd.f32 %v2754, %v2769
      %v2794 = vadd.f32 %v2755, %v2769
      %v2795 = vadd.f32 %v2756, %v2769
      %v2796 = vadd.f32 %v2757, %v2769
      %v2797 = vadd.f32 %v2758, %v2769
      %v2798 = vadd.f32 %v2759, %v2769
      %v2799 = vadd.f32 %v2760, %v2769
      %v2800 = vadd.f32 %v2761, %v2769
      %v2801 = vadd.f32 %v2762, %v2769
      %v2802 = vadd.f32 %v2763, %v2769
      %v2803 = vadd.f32 %v2771, %v361
      %v2804 = vadd.f32 %v2772, %v362
      %v2805 = vadd.f32 %v2773, %v363
      %v2806 = vadd.f32 %v2774, %v364
      %v2807 = vadd.f32 %v2775, %v365
      %v2808 = vadd.f32 %v2776, %v366
      %v2809 = vadd.f32 %v2777, %v367
      %v2810 = vadd.f32 %v2778, %v368
      %v2811 = vadd.f32 %v2779, %v369
      %v2812 = vadd.f32 %v2780, %v370
      %v2813 = vadd.f32 %v2781, %v371
      %v2814 = vadd.f32 %v2782, %v372
      %v2815 = vadd.f32 %v2783, %v373
      %v2816 = vadd.f32 %v2784, %v374
      %v2817 = vadd.f32 %v2785, %v375
      %v2818 = vadd.f32 %v2786, %v376
      %v2819 = vadd.f32 %v2787, %v377
      %v2820 = vadd.f32 %v2788, %v378
      %v2821 = vadd.f32 %v2789, %v379
      %v2822 = vadd.f32 %v2790, %v380
      %v2823 = vadd.f32 %v2791, %v381
      %v2824 = vadd.f32 %v2792, %v382
      %v2825 = vadd.f32 %v2793, %v383
      %v2826 = vadd.f32 %v2794, %v384
      %v2827 = vadd.f32 %v2795, %v385
      %v2828 = vadd.f32 %v2796, %v386
      %v2829 = vadd.f32 %v2797, %v387
      %v2830 = vadd.f32 %v2798, %v388
      %v2831 = vadd.f32 %v2799, %v389
      %v2832 = vadd.f32 %v2800, %v390
      %v2833 = vadd.f32 %v2801, %v391
      %v2834 = vadd.f32 %v2802, %v392
      %v2835 = vmax.f32 %v2803, 0.0
      %v2836 = vmax.f32 %v2804, 0.0
      %v2837 = vmax.f32 %v2805, 0.0
      %v2838 = vmax.f32 %v2806, 0.0
      %v2839 = vmax.f32 %v2807, 0.0
      %v2840 = vmax.f32 %v2808, 0.0
      %v2841 = vmax.f32 %v2809, 0.0
      %v2842 = vmax.f32 %v2810, 0.0
      %v2843 = vmax.f32 %v2811, 0.0
      %v2844 = vmax.f32 %v2812, 0.0
      %v2845 = vmax.f32 %v2813, 0.0
      %v2846 = vmax.f32 %v2814, 0.0
      %v2847 = vmax.f32 %v2815, 0.0
      %v2848 = vmax.f32 %v2816, 0.0
      %v2849 = vmax.f32 %v2817, 0.0
      %v2850 = vmax.f32 %v2818, 0.0
      %v2851 = vmax.f32 %v2819, 0.0
      %v2852 = vmax.f32 %v2820, 0.0
      %v2853 = vmax.f32 %v2821, 0.0
      %v2854 = vmax.f32 %v2822, 0.0
      %v2855 = vmax.f32 %v2823, 0.0
      %v2856 = vmax.f32 %v2824, 0.0
      %v2857 = vmax.f32 %v2825, 0.0
      %v2858 = vmax.f32 %v2826, 0.0
      %v2859 = vmax.f32 %v2827, 0.0
      %v2860 = vmax.f32 %v2828, 0.0
      %v2861 = vmax.f32 %v2829, 0.0
      %v2862 = vmax.f32 %v2830, 0.0
      %v2863 = vmax.f32 %v2831, 0.0
      %v2864 = vmax.f32 %v2832, 0.0
      %v2865 = vmax.f32 %v2833, 0.0
      %v2866 = vmax.f32 %v2834, 0.0
      %2867 = vst.msk [vmem:[%s359] sm:$0xff] %vm417, %v2835
      %2868 = vst.msk [vmem:[%s359 + $0x8] sm:$0xff] %vm417, %v2836
      %2869 = vst.msk [vmem:[%s359 + $0x10] sm:$0xff] %vm417, %v2837
      %2870 = vst.msk [vmem:[%s359 + $0x18] sm:$0xff] %vm417, %v2838
      %2871 = vst.msk [vmem:[%s359 + $0x20] sm:$0xff] %vm417, %v2839
      %2872 = vst.msk [vmem:[%s359 + $0x28] sm:$0xff] %vm417, %v2840
      %2873 = vst.msk [vmem:[%s359 + $0x30] sm:$0xff] %vm417, %v2841
      %2874 = vst.msk [vmem:[%s359 + $0x38] sm:$0xff] %vm417, %v2842
      %2875 = vst.msk [vmem:[%s359 + $0x40] sm:$0xff] %vm417, %v2843
      %2876 = vst.msk [vmem:[%s359 + $0x48] sm:$0xff] %vm417, %v2844
      %2877 = vst.msk [vmem:[%s359 + $0x50] sm:$0xff] %vm417, %v2845
      %2878 = vst.msk [vmem:[%s359 + $0x58] sm:$0xff] %vm417, %v2846
      %2879 = vst.msk [vmem:[%s359 + $0x60] sm:$0xff] %vm417, %v2847
      %2880 = vst.msk [vmem:[%s359 + $0x68] sm:$0xff] %vm417, %v2848
      %2881 = vst.msk [vmem:[%s359 + $0x70] sm:$0xff] %vm417, %v2849
      %2882 = vst.msk [vmem:[%s359 + $0x78] sm:$0xff] %vm417, %v2850
      %2883 = vst.msk [vmem:[%s359 + $0x80] sm:$0xff] %vm417, %v2851
      %2884 = vst.msk [vmem:[%s359 + $0x88] sm:$0xff] %vm417, %v2852
      %2885 = vst.msk [vmem:[%s359 + $0x90] sm:$0xff] %vm417, %v2853
      %2886 = vst.msk [vmem:[%s359 + $0x98] sm:$0xff] %vm417, %v2854
      %2887 = vst.msk [vmem:[%s359 + $0xa0] sm:$0xff] %vm417, %v2855
      %2888 = vst.msk [vmem:[%s359 + $0xa8] sm:$0xff] %vm417, %v2856
      %2889 = vst.msk [vmem:[%s359 + $0xb0] sm:$0xff] %vm417, %v2857
      %2890 = vst.msk [vmem:[%s359 + $0xb8] sm:$0xff] %vm417, %v2858
      %2891 = vst.msk [vmem:[%s359 + $0xc0] sm:$0xff] %vm417, %v2859
      %2892 = vst.msk [vmem:[%s359 + $0xc8] sm:$0xff] %vm417, %v2860
      %2893 = vst.msk [vmem:[%s359 + $0xd0] sm:$0xff] %vm417, %v2861
      %2894 = vst.msk [vmem:[%s359 + $0xd8] sm:$0xff] %vm417, %v2862
      %2895 = vst.msk [vmem:[%s359 + $0xe0] sm:$0xff] %vm417, %v2863
      %2896 = vst.msk [vmem:[%s359 + $0xe8] sm:$0xff] %vm417, %v2864
      %2897 = vst.msk [vmem:[%s359 + $0xf0] sm:$0xff] %vm417, %v2865
      %2898 = vst.msk [vmem:[%s359 + $0xf8] sm:$0xff] %vm417, %v2866
      %p2899 = scmp.lt.s32.totalorder %s21, 1
      %s2900 = scalar_select %p2899, %s21, 1
      %s2901 = smul.addr %s2900, 32
      %s2902 = smul.addr %s2901, 8
      %s2903 = scalar_lea.vmem %s10, %s2902
      // Predicated region
      $region61: #{tpu_custom_call.1} parent=59 // pred_check
        %p2904 = pneg %p254
      $region62: #{tpu_custom_call.1} parent=59 // pred_check_branch
        %2906 = sbr.rel (%p2904) target = $region64
      $region63: #{tpu_custom_call.1} parent=59 // pred_region
        _
      $region64: #{tpu_custom_call.1} parent=59 // pred_fallthru
        _
    $region60: #{tpu_custom_call.1} parent=5 // pred_fallthru
      _
    %p2907 = scmp.le.s32.totalorder 2, %s16
    // Predicated region
    $region65: #{tpu_custom_call.1} parent=5 // pred_check
      %p2908 = pneg %p2907
    $region66: #{tpu_custom_call.1} parent=5 // pred_check_branch
      %2910 = sbr.rel (%p2908) target = $region68
    $region67: #{tpu_custom_call.1} parent=5 // pred_region
      %s2911 = ssub.s32 %s16, 2
      // Predicated region
      $region69: #{tpu_custom_call.1} parent=67 // pred_check
        %p2912 = pneg %p260
      $region70: #{tpu_custom_call.1} parent=67 // pred_check_branch
        %2914 = sbr.rel (%p2912) target = $region72
      $region71: #{tpu_custom_call.1} parent=67 // pred_region
        %p2915 = scmp.lt.s32.totalorder %s22, 1
        %s2916 = scalar_select %p2915, %s22, 1
        %s2917 = smul.addr %s2916, 32
        %s2918 = smul.addr %s2917, 8
        %s2919 = scalar_lea.vmem %s10, %s2918
      $region72: #{tpu_custom_call.1} parent=67 // pred_fallthru
        _
    $region68: #{tpu_custom_call.1} parent=5 // pred_fallthru
      _
  $region6: #{tpu_custom_call.1} parent=0 // loop_footer
    %s20 = sadd.s32 1, %s16
  $region7: #{tpu_custom_call.1} parent=0 // loop_footer_branch
    %15 = sbr.rel target = $region3
  $region8: #{tpu_custom_call.1} parent=0 // loop_exit
    _

</llo_original>
